<compile_context>
chip_gen: v7x
topology: tpu7x:2x2x1
jax: 0.10.0
libtpu: 0.0.40
codegen_flags: <defaults>
</compile_context>

<pallas_src>
import jax
import jax.numpy as jnp
from jax.experimental import pallas as pl
from jax.experimental.pallas import tpu as pltpu


# -----------------------------------------------------------------------------
# Pallas kernel: full residual_up forward for one batch item (lane-dense tiles).
# -----------------------------------------------------------------------------
def _residual_up_kernel(x1_ref, xres_ref, ah_ref, bw_ref,
                        t1_ref, t2_ref, t3_ref,
                        b1_ref, b2_ref, b3_ref, o_ref):
    """Shapes (per grid step n):
      x1_ref  : (1, H1, W1*Cin)       low-res input, lane-dense NHWC rows (f32)
      xres_ref: (1, H,  W*Cin)        skip connection, lane-dense NHWC rows (f32)
      ah_ref  : (H, H1)               H-direction bilinear interp (+pad) matrix (f32)
      bw_ref  : (W1*Cin, W*Cin)       W-direction interp (+pad) matrix kron I_Cin (f32)
      t*_ref  : (3, W*Cin_l, W*Cout)  per-kh block-Toeplitz conv weights, BN scale
                                      and W-padding folded in (bf16)
      b*_ref  : (1, W*Cout)           folded conv-bias + BN bias row (f32)
      o_ref   : (1, H, W*Cout)        lane-dense output (W*Cout = 128 lanes)
    """
    f32 = jnp.float32
    bf16 = jnp.bfloat16
    H = o_ref.shape[1]

    # ---- bilinear upsample (align_corners=True) + pad-to-x_res + residual add,
    #      expressed as two small f32 matmuls against precomputed interp matrices.
    x1 = x1_ref[0].astype(f32)                                      # (H1, W1*Cin)
    up = jnp.dot(ah_ref[...], x1, preferred_element_type=f32)       # (H,  W1*Cin)
    up = jnp.dot(up, bw_ref[...], preferred_element_type=f32)       # (H,  W*Cin)
    act = up + xres_ref[0].astype(f32)                              # residual add

    def conv_bn_relu(act, t_ref, b_ref):
        # "same" padding along H via sublane rotations + boundary masks instead
        # of a padded VMEM scratch: no store->load round trip between layers.
        # (W-direction zero padding is folded into the Toeplitz weights.)
        rows = jax.lax.broadcasted_iota(jnp.int32, act.shape, 0)
        tap0 = jnp.where(rows == 0, 0.0,
                         pltpu.roll(act, 1, 0)).astype(bf16)        # row above
        tap1 = act.astype(bf16)                                     # center row
        tap2 = jnp.where(rows == H - 1, 0.0,
                         pltpu.roll(act, H - 1, 0)).astype(bf16)    # row below
        # 3 accumulating bf16 MXU matmuls (f32 accumulation); acc initialized by
        # the first dot (no zeros materialization).
        acc = jnp.dot(tap0, t_ref[0], preferred_element_type=f32)
        acc += jnp.dot(tap1, t_ref[1], preferred_element_type=f32)
        acc += jnp.dot(tap2, t_ref[2], preferred_element_type=f32)
        # conv-bias + BatchNorm already folded into weights/bias row -> add + ReLU.
        return jnp.maximum(acc + b_ref[...], 0.0)

    act = conv_bn_relu(act, t1_ref, b1_ref)   # Cin  -> Cout
    act = conv_bn_relu(act, t2_ref, b2_ref)   # Cout -> Cout
    act = conv_bn_relu(act, t3_ref, b3_ref)   # Cout -> Cout

    o_ref[0] = act.astype(o_ref.dtype)        # lane-dense (128-lane) store


# -----------------------------------------------------------------------------
# One-time (setup) weight preprocessing -- hoisted OUT of the jitted forward.
# -----------------------------------------------------------------------------
def _interp_matrix_1d(out_size, in_size):
    """PyTorch linear interpolation matrix with align_corners=True."""
    if out_size == 1 or in_size == 1:           # align_corners edge cases
        m = jnp.zeros((out_size, in_size), jnp.float32)
        return m.at[:, 0].set(1.0)
    src = jnp.arange(out_size, dtype=jnp.float32) * (in_size - 1) / (out_size - 1)
    i0 = jnp.clip(jnp.floor(src), 0, in_size - 2).astype(jnp.int32)
    frac = src - i0.astype(jnp.float32)
    rows = jnp.arange(out_size)
    m = jnp.zeros((out_size, in_size), jnp.float32)
    m = m.at[rows, i0].add(1.0 - frac)
    m = m.at[rows, i0 + 1].add(frac)
    return m


def _toeplitz_conv_weights(w_hwio, scale, width):
    """(3,3,Cin,Cout) conv weights (with per-output-channel BN scale folded in)
    -> (3, W*Cin, W*Cout) per-kh block-Toeplitz matrices in bf16.
    Entry [kh, w_in*Cin+ci, w_out*Cout+co] = w[kh, kw, ci, co]*scale[co] with
    kw = w_in - w_out + 1; out-of-range taps stay zero, which encodes the
    W-direction zero padding (pad=1)."""
    _, _, cin, cout = w_hwio.shape
    w_eff = w_hwio.astype(jnp.float32) * scale[None, None, None, :]
    w_in = jnp.arange(width)[None, :, None]
    w_out = jnp.arange(width)[None, None, :]
    kw = jnp.arange(3)[:, None, None]
    sel = (w_in == w_out + kw - 1).astype(jnp.float32)          # (3, W, W)
    t = jnp.einsum("xij,kxco->kicjo", sel, w_eff)
    return t.reshape(3, width * cin, width * cout).astype(jnp.bfloat16)


def prepare_residual_up(params, in_ch, h1, w1, h, w, eps=1e-5):
    """Fold upsample/pad interpolation, conv weights, conv bias and BatchNorm
    (inference) into kernel-ready constants. Call ONCE at setup."""
    dy, dx = h - 2 * h1, w - 2 * w1
    # TODO(synk): negative diffY/diffX (cropping F.pad) is not handled; UNet
    # skip connections always satisfy diff >= 0.
    a_h = jnp.pad(_interp_matrix_1d(2 * h1, h1), ((dy // 2, dy - dy // 2), (0, 0)))
    a_w = jnp.pad(_interp_matrix_1d(2 * w1, w1), ((dx // 2, dx - dx // 2), (0, 0)))
    b_w = jnp.kron(a_w.T, jnp.eye(in_ch, dtype=jnp.float32))        # (W1*Cin, W*Cin)

    scales = [p["gamma"] / jnp.sqrt(p["var"] + eps) for p in params]
    ts = [_toeplitz_conv_weights(p["w"], s, w) for p, s in zip(params, scales)]
    bs = [jnp.tile(p["beta"] + (p["b"] - p["mean"]) * s, w)[None, :]  # (1, W*Cout)
          for p, s in zip(params, scales)]
    return (a_h, b_w, ts[0], ts[1], ts[2], bs[0], bs[1], bs[2])


# -----------------------------------------------------------------------------
# Jitted forward: just the fused pallas_call, lane-dense NHWC in/out.
# -----------------------------------------------------------------------------
@jax.jit
def residual_up_forward(x1_ld, xres_ld, a_h, b_w, t1, t2, t3, b1, b2, b3):
    """x1_ld: (N, H1, W1*Cin), xres_ld: (N, H, W*Cin) lane-dense NHWC rows.
    Returns (N, H, W*Cout) lane-dense NHWC rows."""
    n, h1, wc_low = x1_ld.shape
    _, h, wc_in = xres_ld.shape
    wc_out = t1.shape[-1]

    grid_spec = pltpu.PrefetchScalarGridSpec(
        num_scalar_prefetch=0,
        grid=(n,),
        in_specs=[
            pl.BlockSpec((1, h1, wc_low), lambda i: (i, 0, 0)),
            pl.BlockSpec((1, h, wc_in), lambda i: (i, 0, 0)),
            pl.BlockSpec(a_h.shape, lambda i: (0, 0)),
            pl.BlockSpec(b_w.shape, lambda i: (0, 0)),
            pl.BlockSpec(t1.shape, lambda i: (0, 0, 0)),
            pl.BlockSpec(t2.shape, lambda i: (0, 0, 0)),
            pl.BlockSpec(t3.shape, lambda i: (0, 0, 0)),
            pl.BlockSpec(b1.shape, lambda i: (0, 0)),
            pl.BlockSpec(b2.shape, lambda i: (0, 0)),
            pl.BlockSpec(b3.shape, lambda i: (0, 0)),
        ],
        out_specs=pl.BlockSpec((1, h, wc_out), lambda i: (i, 0, 0)),
    )

    return pl.pallas_call(
        _residual_up_kernel,
        out_shape=jax.ShapeDtypeStruct((n, h, wc_out), xres_ld.dtype),
        grid_spec=grid_spec,
        compiler_params=pltpu.CompilerParams(
            dimension_semantics=("parallel",)),
    )(x1_ld, xres_ld, a_h, b_w, t1, t2, t3, b1, b2, b3)


# -----------------------------------------------------------------------------
# Deterministic synthetic parameters (conv_block = (Conv3x3 => BN => ReLU) x 3).
# -----------------------------------------------------------------------------
def init_residual_up_params(key, in_ch, out_ch):
    params = []
    c_in = in_ch
    for _ in range(3):
        key, kw, kb, kg, kbe, km, kv = jax.random.split(key, 7)
        bound = 1.0 / jnp.sqrt(c_in * 9)
        params.append(dict(
            w=jax.random.uniform(kw, (3, 3, c_in, out_ch), jnp.float32, -bound, bound),
            b=jax.random.uniform(kb, (out_ch,), jnp.float32, -bound, bound),
            gamma=1.0 + 0.1 * jax.random.normal(kg, (out_ch,), jnp.float32),
            beta=0.1 * jax.random.normal(kbe, (out_ch,), jnp.float32),
            mean=0.1 * jax.random.normal(km, (out_ch,), jnp.float32),
            var=jnp.abs(1.0 + 0.1 * jax.random.normal(kv, (out_ch,), jnp.float32)),
        ))
        c_in = out_ch
    return params


# -----------------------------------------------------------------------------
# Pure-JAX f32 reference (independent path) for a correctness check.
# -----------------------------------------------------------------------------
def _reference_forward(x1, x_res, params, eps=1e-5):
    n, c, h_in, w_in = x1.shape
    _, _, hr, wr = x_res.shape

    def lin_idx(out_size, in_size):
        src = jnp.arange(out_size, dtype=jnp.float32) * (in_size - 1) / (out_size - 1)
        i0 = jnp.clip(jnp.floor(src), 0, in_size - 2).astype(jnp.int32)
        return i0, i0 + 1, src - i0.astype(jnp.float32)

    hu, wu = 2 * h_in, 2 * w_in
    h0, h1i, hf = lin_idx(hu, h_in)
    w0, w1i, wf = lin_idx(wu, w_in)
    xh = (x1[:, :, h0, :] * (1.0 - hf)[None, None, :, None]
          + x1[:, :, h1i, :] * hf[None, None, :, None])
    xu = xh[:, :, :, w0] * (1.0 - wf) + xh[:, :, :, w1i] * wf
    dy, dx = hr - hu, wr - wu
    xu = jnp.pad(xu, ((0, 0), (0, 0), (dy // 2, dy - dy // 2),
                      (dx // 2, dx - dx // 2)))
    x = x_res + xu
    for p in params:
        w_oihw = jnp.transpose(p["w"], (3, 2, 0, 1))
        z = jax.lax.conv_general_dilated(
            x, w_oihw, window_strides=(1, 1), padding=((1, 1), (1, 1)),
            dimension_numbers=("NCHW", "OIHW", "NCHW"),
            precision=jax.lax.Precision.HIGHEST)
        z = z + p["b"][None, :, None, None]
        z = ((z - p["mean"][None, :, None, None])
             / jnp.sqrt(p["var"][None, :, None, None] + eps)
             * p["gamma"][None, :, None, None] + p["beta"][None, :, None, None])
        x = jnp.maximum(z, 0.0)
    return x


if __name__ == "__main__":
    key = jax.random.PRNGKey(0)
    k_x1, k_xr, k_p = jax.random.split(key, 3)

    N, in_ch, out_ch = 2, 4, 8
    H1 = W1 = 8            # low-resolution input (gets upsampled 2x)
    H = W = 16             # skip-connection resolution; W*out_ch = 128 lanes

    x1 = jax.random.normal(k_x1, (N, in_ch, H1, W1), jnp.float32)
    x_res = jax.random.normal(k_xr, (N, in_ch, H, W), jnp.float32)
    params = init_residual_up_params(k_p, in_ch, out_ch)

    # One-time setup: fold upsample/pad/conv/BN into kernel-ready constants
    # (hoisted out of the per-call jitted forward per the perf review).
    weights = prepare_residual_up(params, in_ch, H1, W1, H, W)
    weights = tuple(jax.block_until_ready(w) for w in weights)

    # Lane-dense NHWC views. This NCHW -> lane-dense conversion is test-harness
    # plumbing only (the PyTorch spec is NCHW); a real UNet pipeline would keep
    # activations lane-dense NHWC end to end, off the forward's critical path.
    x1_ld = jnp.transpose(x1, (0, 2, 3, 1)).reshape(N, H1, W1 * in_ch)
    xres_ld = jnp.transpose(x_res, (0, 2, 3, 1)).reshape(N, H, W * in_ch)

    y_ld = residual_up_forward(x1_ld, xres_ld, *weights)
    y_ld = jax.block_until_ready(y_ld)

    # lane-dense (N, H, W*Cout) -> NCHW for comparison with the reference.
    y = jnp.transpose(y_ld.reshape(N, H, W, out_ch), (0, 3, 1, 2))

    assert y.shape == (N, out_ch, H, W), y.shape
    assert bool(jnp.all(y >= 0.0)), "ReLU output must be non-negative"

    y_ref = _reference_forward(x1, x_res, params)
    # Tolerance accounts for bf16 MXU operands across three conv layers
    # (f32 accumulation); observed max error is well below this bound.
    assert bool(jnp.allclose(y, y_ref, atol=3e-2, rtol=3e-2)), \
        float(jnp.max(jnp.abs(y - y_ref)))

    print("KERNEL_OK")
</pallas_src>

<mosaic_0001>
module attributes {stable_mosaic.version = 11 : i64} {
  func.func @_residual_up_kernel(%arg0: i32, %arg1: memref<1x8x32xf32, #tpu.memory_space<vmem>>, %arg2: memref<1x16x64xf32, #tpu.memory_space<vmem>>, %arg3: memref<16x8xf32, #tpu.memory_space<vmem>>, %arg4: memref<32x64xf32, #tpu.memory_space<vmem>>, %arg5: memref<3x64x128xbf16, #tpu.memory_space<vmem>>, %arg6: memref<3x128x128xbf16, #tpu.memory_space<vmem>>, %arg7: memref<3x128x128xbf16, #tpu.memory_space<vmem>>, %arg8: memref<1x128xf32, #tpu.memory_space<vmem>>, %arg9: memref<1x128xf32, #tpu.memory_space<vmem>>, %arg10: memref<1x128xf32, #tpu.memory_space<vmem>>, %arg11: memref<1x16x128xf32, #tpu.memory_space<vmem>>) attributes {dimension_semantics = [#tpu.dimension_semantics<parallel>], iteration_bounds = array<i64: 2>, scalar_prefetch = 0 : i64, scratch_operands = 0 : i64, tpu.core_type = #tpu.core_type<tc>, window_params = [{transform_indices = @transform_0, window_bounds = array<i64: 1, 8, 32>}, {transform_indices = @transform_1, window_bounds = array<i64: 1, 16, 64>}, {pipeline_mode = #tpu.pipeline_mode<synchronous>, transform_indices = @transform_2, window_bounds = array<i64: 16, 8>}, {pipeline_mode = #tpu.pipeline_mode<synchronous>, transform_indices = @transform_3, window_bounds = array<i64: 32, 64>}, {pipeline_mode = #tpu.pipeline_mode<synchronous>, transform_indices = @transform_4, window_bounds = array<i64: 3, 64, 128>}, {pipeline_mode = #tpu.pipeline_mode<synchronous>, transform_indices = @transform_5, window_bounds = array<i64: 3, 128, 128>}, {pipeline_mode = #tpu.pipeline_mode<synchronous>, transform_indices = @transform_6, window_bounds = array<i64: 3, 128, 128>}, {pipeline_mode = #tpu.pipeline_mode<synchronous>, transform_indices = @transform_7, window_bounds = array<i64: 1, 128>}, {pipeline_mode = #tpu.pipeline_mode<synchronous>, transform_indices = @transform_8, window_bounds = array<i64: 1, 128>}, {pipeline_mode = #tpu.pipeline_mode<synchronous>, transform_indices = @transform_9, window_bounds = array<i64: 1, 128>}, {transform_indices = @transform_10, window_bounds = array<i64: 1, 16, 128>}]} {
    %c0 = arith.constant 0 : index
    %c0_0 = arith.constant 0 : index
    %c0_1 = arith.constant 0 : index
    %0 = vector.load %arg1[%c0, %c0_0, %c0_1] : memref<1x8x32xf32, #tpu.memory_space<vmem>>, vector<1x8x32xf32>
    %1 = vector.shape_cast %0 : vector<1x8x32xf32> to vector<8x32xf32>
    %c0_2 = arith.constant 0 : index
    %c0_3 = arith.constant 0 : index
    %2 = vector.load %arg3[%c0_2, %c0_3] : memref<16x8xf32, #tpu.memory_space<vmem>>, vector<16x8xf32>
    %cst = arith.constant dense<0.000000e+00> : vector<16x32xf32>
    %3 = tpu.matmul %2, %1, %cst {dimension_numbers = #tpu.dot_dimension_numbers<[1], [0], [0], [1], [0, 0, 1, 1], [], []>} : vector<16x8xf32>, vector<8x32xf32>, vector<16x32xf32> -> vector<16x32xf32>
    %c0_4 = arith.constant 0 : index
    %c0_5 = arith.constant 0 : index
    %4 = vector.load %arg4[%c0_4, %c0_5] : memref<32x64xf32, #tpu.memory_space<vmem>>, vector<32x64xf32>
    %cst_6 = arith.constant dense<0.000000e+00> : vector<16x64xf32>
    %5 = tpu.matmul %3, %4, %cst_6 {dimension_numbers = #tpu.dot_dimension_numbers<[1], [0], [0], [1], [0, 0, 1, 1], [], []>} : vector<16x32xf32>, vector<32x64xf32>, vector<16x64xf32> -> vector<16x64xf32>
    %c0_7 = arith.constant 0 : index
    %c0_8 = arith.constant 0 : index
    %c0_9 = arith.constant 0 : index
    %6 = vector.load %arg2[%c0_7, %c0_8, %c0_9] : memref<1x16x64xf32, #tpu.memory_space<vmem>>, vector<1x16x64xf32>
    %7 = vector.shape_cast %6 : vector<1x16x64xf32> to vector<16x64xf32>
    %8 = arith.addf %5, %7 : vector<16x64xf32>
    %9 = tpu.iota {dimensions = array<i32: 0>} : vector<16x64xi32>
    %c0_i32 = arith.constant 0 : i32
    %10 = vector.broadcast %c0_i32 : i32 to vector<16x64xi32>
    %11 = arith.cmpi eq, %9, %10 : vector<16x64xi32>
    %c1_i32 = arith.constant 1 : i32
    %12 = tpu.dynamic_rotate %8 by %c1_i32 dim 0 : vector<16x64xf32>, i32 -> vector<16x64xf32>
    %cst_10 = arith.constant 0.000000e+00 : f32
    %13 = vector.broadcast %cst_10 : f32 to vector<16x64xf32>
    %14 = arith.select %11, %13, %12 : vector<16x64xi1>, vector<16x64xf32>
    %15 = arith.truncf %14 : vector<16x64xf32> to vector<16x64xbf16>
    %16 = arith.truncf %8 : vector<16x64xf32> to vector<16x64xbf16>
    %c15_i32 = arith.constant 15 : i32
    %17 = vector.broadcast %c15_i32 : i32 to vector<16x64xi32>
    %18 = arith.cmpi eq, %9, %17 : vector<16x64xi32>
    %c15_i32_11 = arith.constant 15 : i32
    %19 = tpu.dynamic_rotate %8 by %c15_i32_11 dim 0 : vector<16x64xf32>, i32 -> vector<16x64xf32>
    %cst_12 = arith.constant 0.000000e+00 : f32
    %20 = vector.broadcast %cst_12 : f32 to vector<16x64xf32>
    %21 = arith.select %18, %20, %19 : vector<16x64xi1>, vector<16x64xf32>
    %22 = arith.truncf %21 : vector<16x64xf32> to vector<16x64xbf16>
    %c0_13 = arith.constant 0 : index
    %c0_14 = arith.constant 0 : index
    %c0_15 = arith.constant 0 : index
    %23 = vector.load %arg5[%c0_13, %c0_14, %c0_15] : memref<3x64x128xbf16, #tpu.memory_space<vmem>>, vector<1x64x128xbf16>
    %24 = vector.shape_cast %23 : vector<1x64x128xbf16> to vector<64x128xbf16>
    %cst_16 = arith.constant dense<0.000000e+00> : vector<16x128xf32>
    %25 = tpu.matmul %15, %24, %cst_16 {dimension_numbers = #tpu.dot_dimension_numbers<[1], [0], [0], [1], [0, 0, 1, 1], [], []>} : vector<16x64xbf16>, vector<64x128xbf16>, vector<16x128xf32> -> vector<16x128xf32>
    %c1 = arith.constant 1 : index
    %c0_17 = arith.constant 0 : index
    %c0_18 = arith.constant 0 : index
    %26 = vector.load %arg5[%c1, %c0_17, %c0_18] : memref<3x64x128xbf16, #tpu.memory_space<vmem>>, vector<1x64x128xbf16>
    %27 = vector.shape_cast %26 : vector<1x64x128xbf16> to vector<64x128xbf16>
    %cst_19 = arith.constant dense<0.000000e+00> : vector<16x128xf32>
    %28 = tpu.matmul %16, %27, %cst_19 {dimension_numbers = #tpu.dot_dimension_numbers<[1], [0], [0], [1], [0, 0, 1, 1], [], []>} : vector<16x64xbf16>, vector<64x128xbf16>, vector<16x128xf32> -> vector<16x128xf32>
    %29 = arith.addf %25, %28 : vector<16x128xf32>
    %c2 = arith.constant 2 : index
    %c0_20 = arith.constant 0 : index
    %c0_21 = arith.constant 0 : index
    %30 = vector.load %arg5[%c2, %c0_20, %c0_21] : memref<3x64x128xbf16, #tpu.memory_space<vmem>>, vector<1x64x128xbf16>
    %31 = vector.shape_cast %30 : vector<1x64x128xbf16> to vector<64x128xbf16>
    %cst_22 = arith.constant dense<0.000000e+00> : vector<16x128xf32>
    %32 = tpu.matmul %22, %31, %cst_22 {dimension_numbers = #tpu.dot_dimension_numbers<[1], [0], [0], [1], [0, 0, 1, 1], [], []>} : vector<16x64xbf16>, vector<64x128xbf16>, vector<16x128xf32> -> vector<16x128xf32>
    %33 = arith.addf %29, %32 : vector<16x128xf32>
    %c0_23 = arith.constant 0 : index
    %c0_24 = arith.constant 0 : index
    %34 = vector.load %arg8[%c0_23, %c0_24] : memref<1x128xf32, #tpu.memory_space<vmem>>, vector<1x128xf32>
    %35 = vector.broadcast %34 : vector<1x128xf32> to vector<16x128xf32>
    %36 = arith.addf %33, %35 : vector<16x128xf32>
    %cst_25 = arith.constant 0.000000e+00 : f32
    %37 = vector.broadcast %cst_25 : f32 to vector<16x128xf32>
    %38 = arith.maximumf %36, %37 : vector<16x128xf32>
    %39 = tpu.iota {dimensions = array<i32: 0>} : vector<16x128xi32>
    %c0_i32_26 = arith.constant 0 : i32
    %40 = vector.broadcast %c0_i32_26 : i32 to vector<16x128xi32>
    %41 = arith.cmpi eq, %39, %40 : vector<16x128xi32>
    %c1_i32_27 = arith.constant 1 : i32
    %42 = tpu.dynamic_rotate %38 by %c1_i32_27 dim 0 : vector<16x128xf32>, i32 -> vector<16x128xf32>
    %cst_28 = arith.constant 0.000000e+00 : f32
    %43 = vector.broadcast %cst_28 : f32 to vector<16x128xf32>
    %44 = arith.select %41, %43, %42 : vector<16x128xi1>, vector<16x128xf32>
    %45 = arith.truncf %44 : vector<16x128xf32> to vector<16x128xbf16>
    %46 = arith.truncf %38 : vector<16x128xf32> to vector<16x128xbf16>
    %c15_i32_29 = arith.constant 15 : i32
    %47 = vector.broadcast %c15_i32_29 : i32 to vector<16x128xi32>
    %48 = arith.cmpi eq, %39, %47 : vector<16x128xi32>
    %c15_i32_30 = arith.constant 15 : i32
    %49 = tpu.dynamic_rotate %38 by %c15_i32_30 dim 0 : vector<16x128xf32>, i32 -> vector<16x128xf32>
    %cst_31 = arith.constant 0.000000e+00 : f32
    %50 = vector.broadcast %cst_31 : f32 to vector<16x128xf32>
    %51 = arith.select %48, %50, %49 : vector<16x128xi1>, vector<16x128xf32>
    %52 = arith.truncf %51 : vector<16x128xf32> to vector<16x128xbf16>
    %c0_32 = arith.constant 0 : index
    %c0_33 = arith.constant 0 : index
    %c0_34 = arith.constant 0 : index
    %53 = vector.load %arg6[%c0_32, %c0_33, %c0_34] : memref<3x128x128xbf16, #tpu.memory_space<vmem>>, vector<1x128x128xbf16>
    %54 = vector.shape_cast %53 : vector<1x128x128xbf16> to vector<128x128xbf16>
    %cst_35 = arith.constant dense<0.000000e+00> : vector<16x128xf32>
    %55 = tpu.matmul %45, %54, %cst_35 {dimension_numbers = #tpu.dot_dimension_numbers<[1], [0], [0], [1], [0, 0, 1, 1], [], []>} : vector<16x128xbf16>, vector<128x128xbf16>, vector<16x128xf32> -> vector<16x128xf32>
    %c1_36 = arith.constant 1 : index
    %c0_37 = arith.constant 0 : index
    %c0_38 = arith.constant 0 : index
    %56 = vector.load %arg6[%c1_36, %c0_37, %c0_38] : memref<3x128x128xbf16, #tpu.memory_space<vmem>>, vector<1x128x128xbf16>
    %57 = vector.shape_cast %56 : vector<1x128x128xbf16> to vector<128x128xbf16>
    %cst_39 = arith.constant dense<0.000000e+00> : vector<16x128xf32>
    %58 = tpu.matmul %46, %57, %cst_39 {dimension_numbers = #tpu.dot_dimension_numbers<[1], [0], [0], [1], [0, 0, 1, 1], [], []>} : vector<16x128xbf16>, vector<128x128xbf16>, vector<16x128xf32> -> vector<16x128xf32>
    %59 = arith.addf %55, %58 : vector<16x128xf32>
    %c2_40 = arith.constant 2 : index
    %c0_41 = arith.constant 0 : index
    %c0_42 = arith.constant 0 : index
    %60 = vector.load %arg6[%c2_40, %c0_41, %c0_42] : memref<3x128x128xbf16, #tpu.memory_space<vmem>>, vector<1x128x128xbf16>
    %61 = vector.shape_cast %60 : vector<1x128x128xbf16> to vector<128x128xbf16>
    %cst_43 = arith.constant dense<0.000000e+00> : vector<16x128xf32>
    %62 = tpu.matmul %52, %61, %cst_43 {dimension_numbers = #tpu.dot_dimension_numbers<[1], [0], [0], [1], [0, 0, 1, 1], [], []>} : vector<16x128xbf16>, vector<128x128xbf16>, vector<16x128xf32> -> vector<16x128xf32>
    %63 = arith.addf %59, %62 : vector<16x128xf32>
    %c0_44 = arith.constant 0 : index
    %c0_45 = arith.constant 0 : index
    %64 = vector.load %arg9[%c0_44, %c0_45] : memref<1x128xf32, #tpu.memory_space<vmem>>, vector<1x128xf32>
    %65 = vector.broadcast %64 : vector<1x128xf32> to vector<16x128xf32>
    %66 = arith.addf %63, %65 : vector<16x128xf32>
    %cst_46 = arith.constant 0.000000e+00 : f32
    %67 = vector.broadcast %cst_46 : f32 to vector<16x128xf32>
    %68 = arith.maximumf %66, %67 : vector<16x128xf32>
    %69 = tpu.iota {dimensions = array<i32: 0>} : vector<16x128xi32>
    %c0_i32_47 = arith.constant 0 : i32
    %70 = vector.broadcast %c0_i32_47 : i32 to vector<16x128xi32>
    %71 = arith.cmpi eq, %69, %70 : vector<16x128xi32>
    %c1_i32_48 = arith.constant 1 : i32
    %72 = tpu.dynamic_rotate %68 by %c1_i32_48 dim 0 : vector<16x128xf32>, i32 -> vector<16x128xf32>
    %cst_49 = arith.constant 0.000000e+00 : f32
    %73 = vector.broadcast %cst_49 : f32 to vector<16x128xf32>
    %74 = arith.select %71, %73, %72 : vector<16x128xi1>, vector<16x128xf32>
    %75 = arith.truncf %74 : vector<16x128xf32> to vector<16x128xbf16>
    %76 = arith.truncf %68 : vector<16x128xf32> to vector<16x128xbf16>
    %c15_i32_50 = arith.constant 15 : i32
    %77 = vector.broadcast %c15_i32_50 : i32 to vector<16x128xi32>
    %78 = arith.cmpi eq, %69, %77 : vector<16x128xi32>
    %c15_i32_51 = arith.constant 15 : i32
    %79 = tpu.dynamic_rotate %68 by %c15_i32_51 dim 0 : vector<16x128xf32>, i32 -> vector<16x128xf32>
    %cst_52 = arith.constant 0.000000e+00 : f32
    %80 = vector.broadcast %cst_52 : f32 to vector<16x128xf32>
    %81 = arith.select %78, %80, %79 : vector<16x128xi1>, vector<16x128xf32>
    %82 = arith.truncf %81 : vector<16x128xf32> to vector<16x128xbf16>
    %c0_53 = arith.constant 0 : index
    %c0_54 = arith.constant 0 : index
    %c0_55 = arith.constant 0 : index
    %83 = vector.load %arg7[%c0_53, %c0_54, %c0_55] : memref<3x128x128xbf16, #tpu.memory_space<vmem>>, vector<1x128x128xbf16>
    %84 = vector.shape_cast %83 : vector<1x128x128xbf16> to vector<128x128xbf16>
    %cst_56 = arith.constant dense<0.000000e+00> : vector<16x128xf32>
    %85 = tpu.matmul %75, %84, %cst_56 {dimension_numbers = #tpu.dot_dimension_numbers<[1], [0], [0], [1], [0, 0, 1, 1], [], []>} : vector<16x128xbf16>, vector<128x128xbf16>, vector<16x128xf32> -> vector<16x128xf32>
    %c1_57 = arith.constant 1 : index
    %c0_58 = arith.constant 0 : index
    %c0_59 = arith.constant 0 : index
    %86 = vector.load %arg7[%c1_57, %c0_58, %c0_59] : memref<3x128x128xbf16, #tpu.memory_space<vmem>>, vector<1x128x128xbf16>
    %87 = vector.shape_cast %86 : vector<1x128x128xbf16> to vector<128x128xbf16>
    %cst_60 = arith.constant dense<0.000000e+00> : vector<16x128xf32>
    %88 = tpu.matmul %76, %87, %cst_60 {dimension_numbers = #tpu.dot_dimension_numbers<[1], [0], [0], [1], [0, 0, 1, 1], [], []>} : vector<16x128xbf16>, vector<128x128xbf16>, vector<16x128xf32> -> vector<16x128xf32>
    %89 = arith.addf %85, %88 : vector<16x128xf32>
    %c2_61 = arith.constant 2 : index
    %c0_62 = arith.constant 0 : index
    %c0_63 = arith.constant 0 : index
    %90 = vector.load %arg7[%c2_61, %c0_62, %c0_63] : memref<3x128x128xbf16, #tpu.memory_space<vmem>>, vector<1x128x128xbf16>
    %91 = vector.shape_cast %90 : vector<1x128x128xbf16> to vector<128x128xbf16>
    %cst_64 = arith.constant dense<0.000000e+00> : vector<16x128xf32>
    %92 = tpu.matmul %82, %91, %cst_64 {dimension_numbers = #tpu.dot_dimension_numbers<[1], [0], [0], [1], [0, 0, 1, 1], [], []>} : vector<16x128xbf16>, vector<128x128xbf16>, vector<16x128xf32> -> vector<16x128xf32>
    %93 = arith.addf %89, %92 : vector<16x128xf32>
    %c0_65 = arith.constant 0 : index
    %c0_66 = arith.constant 0 : index
    %94 = vector.load %arg10[%c0_65, %c0_66] : memref<1x128xf32, #tpu.memory_space<vmem>>, vector<1x128xf32>
    %95 = vector.broadcast %94 : vector<1x128xf32> to vector<16x128xf32>
    %96 = arith.addf %93, %95 : vector<16x128xf32>
    %cst_67 = arith.constant 0.000000e+00 : f32
    %97 = vector.broadcast %cst_67 : f32 to vector<16x128xf32>
    %98 = arith.maximumf %96, %97 : vector<16x128xf32>
    %c0_68 = arith.constant 0 : index
    %c0_69 = arith.constant 0 : index
    %c0_70 = arith.constant 0 : index
    %99 = vector.load %arg11[%c0_68, %c0_69, %c0_70] : memref<1x16x128xf32, #tpu.memory_space<vmem>>, vector<1x16x128xf32>
    %100 = vector.shape_cast %99 : vector<1x16x128xf32> to vector<16x128xf32>
    %101 = vector.shape_cast %98 : vector<16x128xf32> to vector<1x16x128xf32>
    tpu.vector_store %arg11[%c0_68, %c0_69, %c0_70], %101 {strides = array<i32>} : memref<1x16x128xf32, #tpu.memory_space<vmem>>, vector<1x16x128xf32>,
    return
  }
  func.func @transform_0(%arg0: i32) -> (i32, i32, i32) {
    %c0_i32 = arith.constant 0 : i32
    %c0_i32_0 = arith.constant 0 : i32
    %c0_i32_1 = arith.constant 0 : i32
    return %arg0, %c0_i32, %c0_i32_0 : i32, i32, i32
  }
  func.func @transform_1(%arg0: i32) -> (i32, i32, i32) {
    %c0_i32 = arith.constant 0 : i32
    %c0_i32_0 = arith.constant 0 : i32
    %c0_i32_1 = arith.constant 0 : i32
    return %arg0, %c0_i32, %c0_i32_0 : i32, i32, i32
  }
  func.func @transform_2(%arg0: i32) -> (i32, i32) {
    %c0_i32 = arith.constant 0 : i32
    %c0_i32_0 = arith.constant 0 : i32
    %c0_i32_1 = arith.constant 0 : i32
    return %c0_i32, %c0_i32_0 : i32, i32
  }
  func.func @transform_3(%arg0: i32) -> (i32, i32) {
    %c0_i32 = arith.constant 0 : i32
    %c0_i32_0 = arith.constant 0 : i32
    %c0_i32_1 = arith.constant 0 : i32
    return %c0_i32, %c0_i32_0 : i32, i32
  }
  func.func @transform_4(%arg0: i32) -> (i32, i32, i32) {
    %c0_i32 = arith.constant 0 : i32
    %c0_i32_0 = arith.constant 0 : i32
    %c0_i32_1 = arith.constant 0 : i32
    %c0_i32_2 = arith.constant 0 : i32
    return %c0_i32, %c0_i32_0, %c0_i32_1 : i32, i32, i32
  }
  func.func @transform_5(%arg0: i32) -> (i32, i32, i32) {
    %c0_i32 = arith.constant 0 : i32
    %c0_i32_0 = arith.constant 0 : i32
    %c0_i32_1 = arith.constant 0 : i32
    %c0_i32_2 = arith.constant 0 : i32
    return %c0_i32, %c0_i32_0, %c0_i32_1 : i32, i32, i32
  }
  func.func @transform_6(%arg0: i32) -> (i32, i32, i32) {
    %c0_i32 = arith.constant 0 : i32
    %c0_i32_0 = arith.constant 0 : i32
    %c0_i32_1 = arith.constant 0 : i32
    %c0_i32_2 = arith.constant 0 : i32
    return %c0_i32, %c0_i32_0, %c0_i32_1 : i32, i32, i32
  }
  func.func @transform_7(%arg0: i32) -> (i32, i32) {
    %c0_i32 = arith.constant 0 : i32
    %c0_i32_0 = arith.constant 0 : i32
    %c0_i32_1 = arith.constant 0 : i32
    return %c0_i32, %c0_i32_0 : i32, i32
  }
  func.func @transform_8(%arg0: i32) -> (i32, i32) {
    %c0_i32 = arith.constant 0 : i32
    %c0_i32_0 = arith.constant 0 : i32
    %c0_i32_1 = arith.constant 0 : i32
    return %c0_i32, %c0_i32_0 : i32, i32
  }
  func.func @transform_9(%arg0: i32) -> (i32, i32) {
    %c0_i32 = arith.constant 0 : i32
    %c0_i32_0 = arith.constant 0 : i32
    %c0_i32_1 = arith.constant 0 : i32
    return %c0_i32, %c0_i32_0 : i32, i32
  }
  func.func @transform_10(%arg0: i32) -> (i32, i32, i32) {
    %c0_i32 = arith.constant 0 : i32
    %c0_i32_0 = arith.constant 0 : i32
    %c0_i32_1 = arith.constant 0 : i32
    return %arg0, %c0_i32, %c0_i32_0 : i32, i32, i32
  }
}

</mosaic_0001>

<llo_original>
// kernel: residual_up_forward.1
$region0: #{residual_up_forward.1}
  #allocation0 [shape = 'u32[]', space=smem, size = 0x4, offset = 0x4, fixed_abs, tag = 'smem constant byte address 0x4 - core index']
  #allocation1 [shape = 'u32[144,128]{1,0:T(1,128)}', space=vmem, size = 0x12000, scoped, tag = 'internal scratch']
  %s0 = inlined_call_operand.hbm [shape: f32[2,8,32], index: 0, kind: input, shape index: {}]
  %s1 = inlined_call_operand.hbm [shape: f32[2,16,64], index: 1, kind: input, shape index: {}]
  %s2 = inlined_call_operand.vmem [shape: f32[16,8], index: 2, kind: input, shape index: {}]
  %s3 = inlined_call_operand.vmem [shape: f32[32,64], index: 3, kind: input, shape index: {}]
  %s4 = inlined_call_operand.hbm [shape: bf16[3,64,128], index: 4, kind: input, shape index: {}]
  %s5 = inlined_call_operand.hbm [shape: bf16[3,128,128], index: 5, kind: input, shape index: {}]
  %s6 = inlined_call_operand.hbm [shape: bf16[3,128,128], index: 6, kind: input, shape index: {}]
  %s7 = inlined_call_operand.vmem [shape: f32[1,128], index: 7, kind: input, shape index: {}]
  %s8 = inlined_call_operand.vmem [shape: f32[1,128], index: 8, kind: input, shape index: {}]
  %s9 = inlined_call_operand.vmem [shape: f32[1,128], index: 9, kind: input, shape index: {}]
  %s10 = inlined_call_operand.hbm [shape: f32[2,16,128], index: 10, kind: output, shape index: {}]
  %s11 = sld [smem:[#allocation0]]
  $region93: #{residual_up_forward.1} parent=0
    _
  %s13 = ssub.s32 1, %s11
  %s14 = scalar_select 0, %s13, %s11
  $region1: #{residual_up_forward.1} parent=0
    #allocation2 [shape = 'u8[8192]{0}', space=vmem, size = 0x2000, scoped, tag = 'input window, operand 0']
    #allocation3 [shape = 's32[2]{0}', space=sflag, size = 0x8, scoped, tag = 'scoped memory for residual_up_forward.1']
    #allocation4 [shape = 's32[2]{0}', space=sflag, size = 0x8, scoped, tag = 'scoped memory for residual_up_forward.1']
    #allocation5 [shape = 'u8[16384]{0}', space=vmem, size = 0x4000, scoped, tag = 'input window, operand 1']
    #allocation6 [shape = 's32[2]{0}', space=sflag, size = 0x8, scoped, tag = 'scoped memory for residual_up_forward.1']
    #allocation7 [shape = 'u8[49152]{0}', space=vmem, size = 0xc000, scoped, tag = 'input window, operand 4, single buffered']
    #allocation8 [shape = 'u8[98304]{0}', space=vmem, size = 0x18000, scoped, tag = 'input window, operand 5, single buffered']
    #allocation9 [shape = 's32[1]{0}', space=sflag, size = 0x4, scoped, tag = 'scoped memory for residual_up_forward.1']
    #allocation10 [shape = 'u8[98304]{0}', space=vmem, size = 0x18000, scoped, tag = 'input window, operand 6, single buffered']
    #allocation11 [shape = 'u8[16384]{0}', space=vmem, size = 0x4000, scoped, tag = 'output window, operand 0']
    %15 = vsyncpa [#allocation3], 0
    %s16 = scalar_lea.sflag [#allocation3], 1
    %17 = vsyncpa %s16, 0
    %18 = vsyncpa [#allocation6], 0
    %s19 = scalar_lea.sflag [#allocation6], 1
    %20 = vsyncpa %s19, 0
    %21 = vsyncpa [#allocation9], 0
    %22 = vsyncpa [#allocation4], 0
    %s23 = scalar_lea.sflag [#allocation4], 1
    %24 = vsyncpa %s23, 0
    loop: start=0, step=1, limit=4
    $region2: #{residual_up_forward.1} parent=1 // loop_pre_header
      _
    $region3: #{residual_up_forward.1} parent=1 // loop_header
      %s26 = sphi 0, %s30
      %p27 = scmp.ge.s32.totalorder %s26, 4
      %s36 = sphi 0, %s38
      %s39 = sphi 0, %s36
      %s40 = sphi 0, %s39
      %s56 = sphi 0, %s40
      %s62 = sphi 0, %s64
      %s65 = sphi 0, %s62
      %s66 = sphi 0, %s65
      %s82 = sphi 0, %s66
      %s86 = sphi 0, %s86
      %s88 = sphi 0, %s86
      %s89 = sphi 0, %s88
      %s103 = sphi 0, %s89
      %s107 = sphi 0, %s107
      %s109 = sphi 0, %s107
      %s110 = sphi 0, %s109
      %s124 = sphi 0, %s110
      %s128 = sphi 0, %s128
      %s130 = sphi 0, %s128
      %s131 = sphi 0, %s130
      %s145 = sphi 0, %s131
      %s149 = sphi 0, %s149
      %s151 = sphi 0, %s149
      %s152 = sphi 0, %s151
      %s166 = sphi 0, %s152
      %s170 = sphi 0, %s170
      %s172 = sphi 0, %s170
      %s173 = sphi 0, %s172
      %s187 = sphi 0, %s173
      %s191 = sphi 0, %s191
      %s193 = sphi 0, %s191
      %s194 = sphi 0, %s193
      %s208 = sphi 0, %s194
      %s212 = sphi 0, %s212
      %s214 = sphi 0, %s212
      %s215 = sphi 0, %s214
      %s229 = sphi 0, %s215
      %s233 = sphi 0, %s233
      %s235 = sphi 0, %s233
      %s236 = sphi 0, %s235
      %s250 = sphi 0, %s236
      %s256 = sphi 0, %s258
      %s259 = sphi 0, %s256
      %s260 = sphi 0, %s259
      %s276 = sphi 0, %s260
    $region4: #{residual_up_forward.1} parent=1 // loop_header_branch
      %29 = sbr.rel (%p27) target = $region8
    $region5: #{residual_up_forward.1} parent=1 // loop_body
      %s31 = ssub.s32 %s26, 1
      %s32 = ssub.s32 %s26, 2
      %s33 = sadd.s32 %s26, 1
      %s34 = ssub.s32 %s26, %s33
      %p35 = scmp.eq.s32.totalorder %s34, 0
      %s37 = sadd.s32 %s36, 1
      %s38 = scalar_select %p35, %s36, %s37
      %p41 = pneg %p35
      %p42 = scmp.eq.s32.totalorder %s26, 1
      %p43 = por %p41, %p42
      %p44 = scmp.ne.s32.totalorder %s36, %s39
      %p45 = scmp.eq.s32.totalorder %s26, 0
      %p46 = por %p44, %p45
      %p47 = scmp.ne.s32.totalorder %s36, %s39
      %p48 = scmp.eq.s32.totalorder %s31, 1
      %p49 = por %p47, %p48
      %p50 = scmp.ne.s32.totalorder %s39, %s40
      %p51 = scmp.eq.s32.totalorder %s31, 0
      %p52 = por %p50, %p51
      %p53 = scmp.ne.s32.totalorder %s39, %s40
      %p54 = scmp.eq.s32.totalorder %s32, 1
      %p55 = por %p53, %p54
      %p57 = scmp.ne.s32.totalorder %s40, %s56
      %p58 = scmp.eq.s32.totalorder %s32, 0
      %p59 = por %p57, %p58
      %s60 = ssub.s32 %s26, %s33
      %p61 = scmp.eq.s32.totalorder %s60, 0
      %s63 = sadd.s32 %s62, 1
      %s64 = scalar_select %p61, %s62, %s63
      %p67 = pneg %p61
      %p68 = scmp.eq.s32.totalorder %s26, 1
      %p69 = por %p67, %p68
      %p70 = scmp.ne.s32.totalorder %s62, %s65
      %p71 = scmp.eq.s32.totalorder %s26, 0
      %p72 = por %p70, %p71
      %p73 = scmp.ne.s32.totalorder %s62, %s65
      %p74 = scmp.eq.s32.totalorder %s31, 1
      %p75 = por %p73, %p74
      %p76 = scmp.ne.s32.totalorder %s65, %s66
      %p77 = scmp.eq.s32.totalorder %s31, 0
      %p78 = por %p76, %p77
      %p79 = scmp.ne.s32.totalorder %s65, %s66
      %p80 = scmp.eq.s32.totalorder %s32, 1
      %p81 = por %p79, %p80
      %p83 = scmp.ne.s32.totalorder %s66, %s82
      %p84 = scmp.eq.s32.totalorder %s32, 0
      %p85 = por %p83, %p84
      %s87 = sadd.s32 %s86, 1
      %p90 = scmp.eq.s32.totalorder %s26, 1
      %p91 = scmp.ne.s32.totalorder %s86, %s88
      %p92 = scmp.eq.s32.totalorder %s26, 0
      %p93 = por %p91, %p92
      %p94 = scmp.ne.s32.totalorder %s86, %s88
      %p95 = scmp.eq.s32.totalorder %s31, 1
      %p96 = por %p94, %p95
      %p97 = scmp.ne.s32.totalorder %s88, %s89
      %p98 = scmp.eq.s32.totalorder %s31, 0
      %p99 = por %p97, %p98
      %p100 = scmp.ne.s32.totalorder %s88, %s89
      %p101 = scmp.eq.s32.totalorder %s32, 1
      %p102 = por %p100, %p101
      %p104 = scmp.ne.s32.totalorder %s89, %s103
      %p105 = scmp.eq.s32.totalorder %s32, 0
      %p106 = por %p104, %p105
      %s108 = sadd.s32 %s107, 1
      %p111 = scmp.eq.s32.totalorder %s26, 1
      %p112 = scmp.ne.s32.totalorder %s107, %s109
      %p113 = scmp.eq.s32.totalorder %s26, 0
      %p114 = por %p112, %p113
      %p115 = scmp.ne.s32.totalorder %s107, %s109
      %p116 = scmp.eq.s32.totalorder %s31, 1
      %p117 = por %p115, %p116
      %p118 = scmp.ne.s32.totalorder %s109, %s110
      %p119 = scmp.eq.s32.totalorder %s31, 0
      %p120 = por %p118, %p119
      %p121 = scmp.ne.s32.totalorder %s109, %s110
      %p122 = scmp.eq.s32.totalorder %s32, 1
      %p123 = por %p121, %p122
      %p125 = scmp.ne.s32.totalorder %s110, %s124
      %p126 = scmp.eq.s32.totalorder %s32, 0
      %p127 = por %p125, %p126
      %s129 = sadd.s32 %s128, 1
      %p132 = scmp.eq.s32.totalorder %s26, 1
      %p133 = scmp.ne.s32.totalorder %s128, %s130
      %p134 = scmp.eq.s32.totalorder %s26, 0
      %p135 = por %p133, %p134
      %p136 = scmp.ne.s32.totalorder %s128, %s130
      %p137 = scmp.eq.s32.totalorder %s31, 1
      %p138 = por %p136, %p137
      %p139 = scmp.ne.s32.totalorder %s130, %s131
      %p140 = scmp.eq.s32.totalorder %s31, 0
      %p141 = por %p139, %p140
      %p142 = scmp.ne.s32.totalorder %s130, %s131
      %p143 = scmp.eq.s32.totalorder %s32, 1
      %p144 = por %p142, %p143
      %p146 = scmp.ne.s32.totalorder %s131, %s145
      %p147 = scmp.eq.s32.totalorder %s32, 0
      %p148 = por %p146, %p147
      %s150 = sadd.s32 %s149, 1
      %p153 = scmp.eq.s32.totalorder %s26, 1
      %p154 = scmp.ne.s32.totalorder %s149, %s151
      %p155 = scmp.eq.s32.totalorder %s26, 0
      %p156 = por %p154, %p155
      %p157 = scmp.ne.s32.totalorder %s149, %s151
      %p158 = scmp.eq.s32.totalorder %s31, 1
      %p159 = por %p157, %p158
      %p160 = scmp.ne.s32.totalorder %s151, %s152
      %p161 = scmp.eq.s32.totalorder %s31, 0
      %p162 = por %p160, %p161
      %p163 = scmp.ne.s32.totalorder %s151, %s152
      %p164 = scmp.eq.s32.totalorder %s32, 1
      %p165 = por %p163, %p164
      %p167 = scmp.ne.s32.totalorder %s152, %s166
      %p168 = scmp.eq.s32.totalorder %s32, 0
      %p169 = por %p167, %p168
      %s171 = sadd.s32 %s170, 1
      %p174 = scmp.eq.s32.totalorder %s26, 1
      %p175 = scmp.ne.s32.totalorder %s170, %s172
      %p176 = scmp.eq.s32.totalorder %s26, 0
      %p177 = por %p175, %p176
      %p178 = scmp.ne.s32.totalorder %s170, %s172
      %p179 = scmp.eq.s32.totalorder %s31, 1
      %p180 = por %p178, %p179
      %p181 = scmp.ne.s32.totalorder %s172, %s173
      %p182 = scmp.eq.s32.totalorder %s31, 0
      %p183 = por %p181, %p182
      %p184 = scmp.ne.s32.totalorder %s172, %s173
      %p185 = scmp.eq.s32.totalorder %s32, 1
      %p186 = por %p184, %p185
      %p188 = scmp.ne.s32.totalorder %s173, %s187
      %p189 = scmp.eq.s32.totalorder %s32, 0
      %p190 = por %p188, %p189
      %s192 = sadd.s32 %s191, 1
      %p195 = scmp.eq.s32.totalorder %s26, 1
      %p196 = scmp.ne.s32.totalorder %s191, %s193
      %p197 = scmp.eq.s32.totalorder %s26, 0
      %p198 = por %p196, %p197
      %p199 = scmp.ne.s32.totalorder %s191, %s193
      %p200 = scmp.eq.s32.totalorder %s31, 1
      %p201 = por %p199, %p200
      %p202 = scmp.ne.s32.totalorder %s193, %s194
      %p203 = scmp.eq.s32.totalorder %s31, 0
      %p204 = por %p202, %p203
      %p205 = scmp.ne.s32.totalorder %s193, %s194
      %p206 = scmp.eq.s32.totalorder %s32, 1
      %p207 = por %p205, %p206
      %p209 = scmp.ne.s32.totalorder %s194, %s208
      %p210 = scmp.eq.s32.totalorder %s32, 0
      %p211 = por %p209, %p210
      %s213 = sadd.s32 %s212, 1
      %p216 = scmp.eq.s32.totalorder %s26, 1
      %p217 = scmp.ne.s32.totalorder %s212, %s214
      %p218 = scmp.eq.s32.totalorder %s26, 0
      %p219 = por %p217, %p218
      %p220 = scmp.ne.s32.totalorder %s212, %s214
      %p221 = scmp.eq.s32.totalorder %s31, 1
      %p222 = por %p220, %p221
      %p223 = scmp.ne.s32.totalorder %s214, %s215
      %p224 = scmp.eq.s32.totalorder %s31, 0
      %p225 = por %p223, %p224
      %p226 = scmp.ne.s32.totalorder %s214, %s215
      %p227 = scmp.eq.s32.totalorder %s32, 1
      %p228 = por %p226, %p227
      %p230 = scmp.ne.s32.totalorder %s215, %s229
      %p231 = scmp.eq.s32.totalorder %s32, 0
      %p232 = por %p230, %p231
      %s234 = sadd.s32 %s233, 1
      %p237 = scmp.eq.s32.totalorder %s26, 1
      %p238 = scmp.ne.s32.totalorder %s233, %s235
      %p239 = scmp.eq.s32.totalorder %s26, 0
      %p240 = por %p238, %p239
      %p241 = scmp.ne.s32.totalorder %s233, %s235
      %p242 = scmp.eq.s32.totalorder %s31, 1
      %p243 = por %p241, %p242
      %p244 = scmp.ne.s32.totalorder %s235, %s236
      %p245 = scmp.eq.s32.totalorder %s31, 0
      %p246 = por %p244, %p245
      %p247 = scmp.ne.s32.totalorder %s235, %s236
      %p248 = scmp.eq.s32.totalorder %s32, 1
      %p249 = por %p247, %p248
      %p251 = scmp.ne.s32.totalorder %s236, %s250
      %p252 = scmp.eq.s32.totalorder %s32, 0
      %p253 = por %p251, %p252
      %s254 = ssub.s32 %s26, %s33
      %p255 = scmp.eq.s32.totalorder %s254, 0
      %s257 = sadd.s32 %s256, 1
      %s258 = scalar_select %p255, %s256, %s257
      %p261 = pneg %p255
      %p262 = scmp.eq.s32.totalorder %s26, 1
      %p263 = por %p261, %p262
      %p264 = scmp.ne.s32.totalorder %s256, %s259
      %p265 = scmp.eq.s32.totalorder %s26, 0
      %p266 = por %p264, %p265
      %p267 = scmp.ne.s32.totalorder %s256, %s259
      %p268 = scmp.eq.s32.totalorder %s31, 1
      %p269 = por %p267, %p268
      %p270 = scmp.ne.s32.totalorder %s259, %s260
      %p271 = scmp.eq.s32.totalorder %s31, 0
      %p272 = por %p270, %p271
      %p273 = scmp.ne.s32.totalorder %s259, %s260
      %p274 = scmp.eq.s32.totalorder %s32, 1
      %p275 = por %p273, %p274
      %p277 = scmp.ne.s32.totalorder %s260, %s276
      %p278 = scmp.eq.s32.totalorder %s32, 0
      %p279 = por %p277, %p278
      %p280 = scmp.le.s32.totalorder 1, %s26
      %p281 = scmp.lt.s32.totalorder %s26, 3
      %p282 = pnand %p280, %p281
      %p283 = pneg %p282
      // Predicated region
      $region9: #{residual_up_forward.1} parent=5 // pred_check
        _
      $region10: #{residual_up_forward.1} parent=5 // pred_check_branch
        %285 = sbr.rel (%p282) target = $region12
      $region11: #{residual_up_forward.1} parent=5 // pred_region
        %s286 = ssub.s32 %s26, 1
        // Predicated region
        $region13: #{residual_up_forward.1} parent=11 // pred_check
          %p287 = pneg %p99
        $region14: #{residual_up_forward.1} parent=11 // pred_check_branch
          %289 = sbr.rel (%p287) target = $region16
        $region15: #{residual_up_forward.1} parent=11 // pred_region
          _
        $region16: #{residual_up_forward.1} parent=11 // pred_fallthru
          _
        // Predicated region
        $region17: #{residual_up_forward.1} parent=11 // pred_check
          %p290 = pneg %p120
        $region18: #{residual_up_forward.1} parent=11 // pred_check_branch
          %292 = sbr.rel (%p290) target = $region20
        $region19: #{residual_up_forward.1} parent=11 // pred_region
          _
        $region20: #{residual_up_forward.1} parent=11 // pred_fallthru
          _
        // Predicated region
        $region21: #{residual_up_forward.1} parent=11 // pred_check
          %p293 = pneg %p141
        $region22: #{residual_up_forward.1} parent=11 // pred_check_branch
          %295 = sbr.rel (%p293) target = $region24
        $region23: #{residual_up_forward.1} parent=11 // pred_region
          %s297 = ssub.s32 1536, 1536
          %298 = vsyncadd [#allocation6], %s297
          %s299 = sshll.u32 [#allocation7], 4
          %s300 = int_to_ptr.vmem [resolvable:$true] %s299
          %305 = dma.hbm_to_vmem [thread:$0]  %s4, 1536, %s300, [#allocation6], 64, 64, 4
        $region24: #{residual_up_forward.1} parent=11 // pred_fallthru
          _
        // Predicated region
        $region25: #{residual_up_forward.1} parent=11 // pred_check
          %p306 = pneg %p162
        $region26: #{residual_up_forward.1} parent=11 // pred_check_branch
          %308 = sbr.rel (%p306) target = $region28
        $region27: #{residual_up_forward.1} parent=11 // pred_region
          %s310 = ssub.s32 3072, 3072
          %311 = vsyncadd [#allocation9], %s310
          %s312 = sshll.u32 [#allocation8], 4
          %s313 = int_to_ptr.vmem [resolvable:$true] %s312
          %318 = dma.hbm_to_vmem [thread:$0]  %s5, 3072, %s313, [#allocation9], 64, 64, 4
        $region28: #{residual_up_forward.1} parent=11 // pred_fallthru
          _
        // Predicated region
        $region29: #{residual_up_forward.1} parent=11 // pred_check
          %p319 = pneg %p183
        $region30: #{residual_up_forward.1} parent=11 // pred_check_branch
          %321 = sbr.rel (%p319) target = $region32
        $region31: #{residual_up_forward.1} parent=11 // pred_region
          %s323 = ssub.s32 3072, 3072
          %324 = vsyncadd [#allocation9], %s323
          %s325 = sshll.u32 [#allocation10], 4
          %s326 = int_to_ptr.vmem [resolvable:$true] %s325
          %331 = dma.hbm_to_vmem [thread:$0]  %s6, 3072, %s326, [#allocation9], 64, 64, 4
        $region32: #{residual_up_forward.1} parent=11 // pred_fallthru
          _
        // Predicated region
        $region33: #{residual_up_forward.1} parent=11 // pred_check
          %p332 = pneg %p204
        $region34: #{residual_up_forward.1} parent=11 // pred_check_branch
          %334 = sbr.rel (%p332) target = $region36
        $region35: #{residual_up_forward.1} parent=11 // pred_region
          _
        $region36: #{residual_up_forward.1} parent=11 // pred_fallthru
          _
        // Predicated region
        $region37: #{residual_up_forward.1} parent=11 // pred_check
          %p335 = pneg %p225
        $region38: #{residual_up_forward.1} parent=11 // pred_check_branch
          %337 = sbr.rel (%p335) target = $region40
        $region39: #{residual_up_forward.1} parent=11 // pred_region
          _
        $region40: #{residual_up_forward.1} parent=11 // pred_fallthru
          _
        // Predicated region
        $region41: #{residual_up_forward.1} parent=11 // pred_check
          %p338 = pneg %p246
        $region42: #{residual_up_forward.1} parent=11 // pred_check_branch
          %340 = sbr.rel (%p338) target = $region44
        $region43: #{residual_up_forward.1} parent=11 // pred_region
          _
        $region44: #{residual_up_forward.1} parent=11 // pred_fallthru
          _
      $region12: #{residual_up_forward.1} parent=5 // pred_fallthru
        _
      %p341 = scmp.lt.s32.totalorder %s26, 2
      // Predicated region
      $region45: #{residual_up_forward.1} parent=5 // pred_check
        %p342 = pneg %p341
      $region46: #{residual_up_forward.1} parent=5 // pred_check_branch
        %344 = sbr.rel (%p342) target = $region48
      $region47: #{residual_up_forward.1} parent=5 // pred_region
        // Predicated region
        $region49: #{residual_up_forward.1} parent=47 // pred_check
          %p345 = pneg %p46
        $region50: #{residual_up_forward.1} parent=47 // pred_check_branch
          %347 = sbr.rel (%p345) target = $region52
        $region51: #{residual_up_forward.1} parent=47 // pred_region
          %s348 = sand.u32 %s36, 1
          %s349 = scalar_lea.sflag [#allocation3], %s348
          %s350 = sand.u32 %s36, 1
          %s351 = smul.addr %s350, 8
          %s352 = scalar_lea.vmem [#allocation2], %s351
          %s354 = ssub.s32 128, 128
          %355 = vsyncadd %s349, %s354
          %s356 = smul.addr %s26, 128
          %s357 = scalar_lea.hbm %s0, %s356
          %s359 = sshll.u32 %s352, 4
          %s360 = int_to_ptr.vmem [resolvable:$true] %s359
          %362 = dma.hbm_to_vmem [thread:$0]  %s357, 128, %s360, %s349
        $region52: #{residual_up_forward.1} parent=47 // pred_fallthru
          _
        // Predicated region
        $region53: #{residual_up_forward.1} parent=47 // pred_check
          %p363 = pneg %p72
        $region54: #{residual_up_forward.1} parent=47 // pred_check_branch
          %365 = sbr.rel (%p363) target = $region56
        $region55: #{residual_up_forward.1} parent=47 // pred_region
          %s366 = sand.u32 %s26, 1
          %s367 = scalar_lea.sflag [#allocation6], %s366
          %s368 = sand.u32 %s62, 1
          %s369 = smul.addr %s368, 16
          %s370 = scalar_lea.vmem [#allocation5], %s369
          %s372 = ssub.s32 256, 256
          %373 = vsyncadd %s367, %s372
          %s374 = smul.addr %s26, 2
          %s375 = smul.addr %s374, 128
          %s376 = scalar_lea.hbm %s1, %s375
          %s377 = sshll.u32 %s370, 4
          %s378 = int_to_ptr.vmem [resolvable:$true] %s377
          %383 = dma.hbm_to_vmem [thread:$0]  %s376, 256, %s378, %s367, 128, 128, 8
        $region56: #{residual_up_forward.1} parent=47 // pred_fallthru
          _
      $region48: #{residual_up_forward.1} parent=5 // pred_fallthru
        _
      %p384 = scmp.le.s32.totalorder 1, %s26
      %p385 = scmp.lt.s32.totalorder %s26, 3
      %p386 = pnand %p384, %p385
      %p387 = pneg %p386
      // Predicated region
      $region57: #{residual_up_forward.1} parent=5 // pred_check
        _
      $region58: #{residual_up_forward.1} parent=5 // pred_check_branch
        %389 = sbr.rel (%p386) target = $region60
      $region59: #{residual_up_forward.1} parent=5 // pred_region
        %s390 = ssub.s32 %s26, 1
        %s391 = sand.u32 %s39, 1
        %s392 = scalar_lea.sflag [#allocation3], %s391
        %s393 = sand.u32 %s39, 1
        %s394 = smul.addr %s393, 8
        %s395 = scalar_lea.vmem [#allocation2], %s394
        // Predicated region
        $region61: #{residual_up_forward.1} parent=59 // pred_check
          %p396 = pneg %p52
        $region62: #{residual_up_forward.1} parent=59 // pred_check_branch
          %398 = sbr.rel (%p396) target = $region64
        $region63: #{residual_up_forward.1} parent=59 // pred_region
          %399 = dma.done %s392, 128
        $region64: #{residual_up_forward.1} parent=59 // pred_fallthru
          _
        %s400 = sand.u32 %s31, 1
        %s401 = scalar_lea.sflag [#allocation6], %s400
        %s402 = sand.u32 %s65, 1
        %s403 = smul.addr %s402, 16
        %s404 = scalar_lea.vmem [#allocation5], %s403
        // Predicated region
        $region65: #{residual_up_forward.1} parent=59 // pred_check
          %p405 = pneg %p78
        $region66: #{residual_up_forward.1} parent=59 // pred_check_branch
          %407 = sbr.rel (%p405) target = $region68
        $region67: #{residual_up_forward.1} parent=59 // pred_region
          %408 = dma.done %s401, 256
        $region68: #{residual_up_forward.1} parent=59 // pred_fallthru
          _
        // Predicated region
        $region69: #{residual_up_forward.1} parent=59 // pred_check
          %p409 = pneg %p141
        $region70: #{residual_up_forward.1} parent=59 // pred_check_branch
          %411 = sbr.rel (%p409) target = $region72
        $region71: #{residual_up_forward.1} parent=59 // pred_region
          %412 = dma.done [#allocation6], 1536
        $region72: #{residual_up_forward.1} parent=59 // pred_fallthru
          _
        // Predicated region
        $region73: #{residual_up_forward.1} parent=59 // pred_check
          %p413 = pneg %p162
        $region74: #{residual_up_forward.1} parent=59 // pred_check_branch
          %415 = sbr.rel (%p413) target = $region76
        $region75: #{residual_up_forward.1} parent=59 // pred_region
          %416 = dma.done [#allocation9], 3072
        $region76: #{residual_up_forward.1} parent=59 // pred_fallthru
          _
        // Predicated region
        $region77: #{residual_up_forward.1} parent=59 // pred_check
          %p417 = pneg %p183
        $region78: #{residual_up_forward.1} parent=59 // pred_check_branch
          %419 = sbr.rel (%p417) target = $region80
        $region79: #{residual_up_forward.1} parent=59 // pred_region
          %420 = dma.done [#allocation9], 3072
        $region80: #{residual_up_forward.1} parent=59 // pred_fallthru
          _
        %s421 = sand.u32 %s39, 1
        %s422 = scalar_lea.sflag [#allocation3], %s421
        %s423 = sand.u32 %s39, 1
        %s424 = smul.addr %s423, 8
        %s425 = scalar_lea.vmem [#allocation2], %s424
        %p426 = pneg %p52
        %p427 = pneg %p49
        %s428 = sand.u32 %s31, 1
        %s429 = scalar_lea.sflag [#allocation6], %s428
        %s430 = sand.u32 %s65, 1
        %s431 = smul.addr %s430, 16
        %s432 = scalar_lea.vmem [#allocation5], %s431
        %p433 = pneg %p78
        %p434 = pneg %p75
        %p435 = pneg %p99
        %p436 = pneg %p96
        %p437 = pneg %p120
        %p438 = pneg %p117
        %p439 = pneg %p141
        %p440 = pneg %p138
        %p441 = pneg %p162
        %p442 = pneg %p159
        %p443 = pneg %p183
        %p444 = pneg %p180
        %p445 = pneg %p204
        %p446 = pneg %p201
        %p447 = pneg %p225
        %p448 = pneg %p222
        %p449 = pneg %p246
        %p450 = pneg %p243
        %p451 = pneg %p272
        %p452 = pneg %p269
        %s453 = sand.u32 %s259, 1
        %s454 = scalar_lea.sflag [#allocation4], %s453
        %s455 = sand.u32 %s259, 1
        %s456 = smul.addr %s455, 16
        %s457 = scalar_lea.vmem [#allocation11], %s456
        %v459 = vld [vmem:[%s395] sm:$0xff]
        %v460 = vld [vmem:[%s2] sm:$0xff]
        %v461 = vld [vmem:[%s2 + $0x8] sm:$0xff]
        %vm462 = vcmask 64512
        %v464 = vsel %vm462, %v460, 0
        %v467 = vsel %vm462, %v461, 0
        %469 = vmatprep.subr.mxu0 0.0
        %470 = vmatpush1.msra.mxu0 %v459
        %471 = vmatprep.subr.mxu0 0.0
        %472 = vmatpush1.msra.mxu0 0.0
        %473 = vmatprep.subr.mxu0 0.0
        %474 = vmatpush1.msra.mxu0 0.0
        %475 = vmatprep.subr.mxu0 0.0
        %476 = vmatpush1.msra.mxu0 0.0
        %477 = vmatprep.subr.mxu0 0.0
        %478 = vmatpush1.msra.mxu0 0.0
        %479 = vmatprep.subr.mxu0 0.0
        %480 = vmatpush1.msra.mxu0 0.0
        %481 = vmatprep.subr.mxu0 0.0
        %482 = vmatpush1.msra.mxu0 0.0
        %483 = vmatprep.subr.mxu0 0.0
        %484 = vmatpush1.msra.mxu0 0.0
        %485 = vmatprep.subr.mxu0 0.0
        %486 = vmatpush1.msra.mxu0 0.0
        %487 = vmatprep.subr.mxu0 0.0
        %488 = vmatpush1.msra.mxu0 0.0
        %489 = vmatprep.subr.mxu0 0.0
        %490 = vmatpush1.msra.mxu0 0.0
        %491 = vmatprep.subr.mxu0 0.0
        %492 = vmatpush1.msra.mxu0 0.0
        %493 = vmatprep.subr.mxu0 0.0
        %494 = vmatpush1.msra.mxu0 0.0
        %495 = vmatprep.subr.mxu0 0.0
        %496 = vmatpush1.msra.mxu0 0.0
        %497 = vmatprep.subr.mxu0 0.0
        %498 = vmatpush1.msra.mxu0 0.0
        %499 = vmatprep.subr.mxu0 0.0
        %500 = vmatpush1.msra.mxu0 0.0
        %501 = vmatprep.subr.mxu0 0.0
        %502 = vmatpush1.msra.mxu0 0.0
        %503 = vmatprep.subr.mxu0 0.0
        %504 = vmatpush1.msra.mxu0 0.0
        %505 = vmatprep.subr.mxu0 0.0
        %506 = vmatpush1.msra.mxu0 0.0
        %507 = vmatprep.subr.mxu0 0.0
        %508 = vmatpush1.msra.mxu0 0.0
        %509 = vmatprep.subr.mxu0 0.0
        %510 = vmatpush1.msra.mxu0 0.0
        %511 = vmatprep.subr.mxu0 0.0
        %512 = vmatpush1.msra.mxu0 0.0
        %513 = vmatprep.subr.mxu0 0.0
        %514 = vmatpush1.msra.mxu0 0.0
        %515 = vmatprep.subr.mxu0 0.0
        %516 = vmatpush1.msra.mxu0 0.0
        %517 = vmatprep.subr.mxu0 0.0
        %518 = vmatpush1.msra.mxu0 0.0
        %519 = vmatprep.subr.mxu0 0.0
        %520 = vmatpush1.msra.mxu0 0.0
        %521 = vmatprep.subr.mxu0 0.0
        %522 = vmatpush1.msra.mxu0 0.0
        %523 = vmatprep.subr.mxu0 0.0
        %524 = vmatpush1.msra.mxu0 0.0
        %525 = vmatprep.subr.mxu0 0.0
        %526 = vmatpush1.msra.mxu0 0.0
        %527 = vmatprep.subr.mxu0 0.0
        %528 = vmatpush1.msra.mxu0 0.0
        %529 = vmatprep.subr.mxu0 0.0
        %530 = vmatpush1.msra.mxu0 0.0
        %531 = vmatprep.subr.mxu0 0.0
        %532 = vmatpush1.msra.mxu0 0.0
        %533 = vmatprep.mubr.f32.mxu0 0.0
        %534 = vmatmul.mubr.f32.gmra.mrb[0].mxu0 %v464
        %v535 = vpop.f32.mrb[0].mxu0
        %v536 = vadd.f32 0.0, %v535
        %v537 = vpop.f32.mrb[0].mxu0
        %538 = vmatprep.mubr.f32.mxu0 0.0
        %539 = vmatmul.mubr.f32.gmra.mrb[0].mxu0 %v467
        %v540 = vpop.f32.mrb[0].mxu0
        %v541 = vadd.f32 0.0, %v540
        %v542 = vpop.f32.mrb[0].mxu0
        %543 = vdwg.mxu0
        %v544 = vld [vmem:[%s3] sm:$0xff]
        %v545 = vld [vmem:[%s3 + $0x8] sm:$0xff]
        %v546 = vld [vmem:[%s3 + $0x10] sm:$0xff]
        %v547 = vld [vmem:[%s3 + $0x18] sm:$0xff]
        %v548 = vld [vmem:[%s404] sm:$0xff]
        %v549 = vld [vmem:[%s404 + $0x8] sm:$0xff]
        %vm550 = vcmask 261120
        %v552 = vsel %vm550, %v536, 0
        %v555 = vsel %vm550, %v541, 0
        %557 = vmatprep.subr.mxu0 0.0
        %558 = vmatpush1.msra.mxu0 %v544
        %559 = vmatprep.subr.mxu0 0.0
        %560 = vmatpush1.msra.mxu0 %v545
        %561 = vmatprep.subr.mxu0 0.0
        %562 = vmatpush1.msra.mxu0 %v546
        %563 = vmatprep.subr.mxu0 0.0
        %564 = vmatpush1.msra.mxu0 %v547
        %565 = vmatprep.subr.mxu0 0.0
        %566 = vmatpush1.msra.mxu0 0.0
        %567 = vmatprep.subr.mxu0 0.0
        %568 = vmatpush1.msra.mxu0 0.0
        %569 = vmatprep.subr.mxu0 0.0
        %570 = vmatpush1.msra.mxu0 0.0
        %571 = vmatprep.subr.mxu0 0.0
        %572 = vmatpush1.msra.mxu0 0.0
        %573 = vmatprep.subr.mxu0 0.0
        %574 = vmatpush1.msra.mxu0 0.0
        %575 = vmatprep.subr.mxu0 0.0
        %576 = vmatpush1.msra.mxu0 0.0
        %577 = vmatprep.subr.mxu0 0.0
        %578 = vmatpush1.msra.mxu0 0.0
        %579 = vmatprep.subr.mxu0 0.0
        %580 = vmatpush1.msra.mxu0 0.0
        %581 = vmatprep.subr.mxu0 0.0
        %582 = vmatpush1.msra.mxu0 0.0
        %583 = vmatprep.subr.mxu0 0.0
        %584 = vmatpush1.msra.mxu0 0.0
        %585 = vmatprep.subr.mxu0 0.0
        %586 = vmatpush1.msra.mxu0 0.0
        %587 = vmatprep.subr.mxu0 0.0
        %588 = vmatpush1.msra.mxu0 0.0
        %589 = vmatprep.subr.mxu0 0.0
        %590 = vmatpush1.msra.mxu0 0.0
        %591 = vmatprep.subr.mxu0 0.0
        %592 = vmatpush1.msra.mxu0 0.0
        %593 = vmatprep.subr.mxu0 0.0
        %594 = vmatpush1.msra.mxu0 0.0
        %595 = vmatprep.subr.mxu0 0.0
        %596 = vmatpush1.msra.mxu0 0.0
        %597 = vmatprep.subr.mxu0 0.0
        %598 = vmatpush1.msra.mxu0 0.0
        %599 = vmatprep.subr.mxu0 0.0
        %600 = vmatpush1.msra.mxu0 0.0
        %601 = vmatprep.subr.mxu0 0.0
        %602 = vmatpush1.msra.mxu0 0.0
        %603 = vmatprep.subr.mxu0 0.0
        %604 = vmatpush1.msra.mxu0 0.0
        %605 = vmatprep.subr.mxu0 0.0
        %606 = vmatpush1.msra.mxu0 0.0
        %607 = vmatprep.subr.mxu0 0.0
        %608 = vmatpush1.msra.mxu0 0.0
        %609 = vmatprep.subr.mxu0 0.0
        %610 = vmatpush1.msra.mxu0 0.0
        %611 = vmatprep.subr.mxu0 0.0
        %612 = vmatpush1.msra.mxu0 0.0
        %613 = vmatprep.subr.mxu0 0.0
        %614 = vmatpush1.msra.mxu0 0.0
        %615 = vmatprep.subr.mxu0 0.0
        %616 = vmatpush1.msra.mxu0 0.0
        %617 = vmatprep.subr.mxu0 0.0
        %618 = vmatpush1.msra.mxu0 0.0
        %619 = vmatprep.subr.mxu0 0.0
        %620 = vmatpush1.msra.mxu0 0.0
        %621 = vmatprep.mubr.f32.mxu0 0.0
        %622 = vmatmul.mubr.f32.gmra.mrb[0].mxu0 %v552
        %v623 = vpop.f32.mrb[0].mxu0
        %v624 = vadd.f32 %v548, %v623
        %v625 = vpop.f32.mrb[0].mxu0
        %626 = vmatprep.mubr.f32.mxu0 0.0
        %627 = vmatmul.mubr.f32.gmra.mrb[0].mxu0 %v555
        %v628 = vpop.f32.mrb[0].mxu0
        %v629 = vadd.f32 %v549, %v628
        %v630 = vpop.f32.mrb[0].mxu0
        %631 = vdwg.mxu0
        %v632 = vlaneseq
        %v633 = vshrl.u32 %v632, 7
        %v634 = vadd.s32 %v633, 8
        %vm635 = vcmp.eq.s32.totalorder %v633, 0
        %vm636 = vcmp.eq.s32.totalorder %v634, 0
        %v637 = vrot.slane %v624, 7
        %v638 = vrot.slane %v629, 7
        %vm639 = vcmp.lt.s32.totalorder %v633, 1
        %v640 = vsel %vm639, %v637, %v638
        %v641 = vsel %vm639, %v638, %v637
        %v642 = vsel %vm635, 0.0, %v641
        %v643 = vsel %vm636, 0.0, %v640
        %v644 = vpack.c.bf16 %v643, %v642
        %v645 = vpack.c.bf16 %v629, %v624
        %vm646 = vcmp.eq.s32.totalorder %v633, 15
        %vm647 = vcmp.eq.s32.totalorder %v634, 15
        %v648 = vrot.slane %v624, 1
        %v649 = vrot.slane %v629, 1
        %vm650 = vcmp.lt.s32.totalorder %v633, 7
        %v651 = vsel %vm650, %v648, %v649
        %v652 = vsel %vm650, %v649, %v648
        %v653 = vsel %vm646, 0.0, %v651
        %v654 = vsel %vm647, 0.0, %v652
        %v655 = vpack.c.bf16 %v654, %v653
        %v656 = vld [vmem:[#allocation7] sm:$0xf]
        %v657 = vld [vmem:[#allocation7 + $0x4] sm:$0xf]
        %v658 = vld [vmem:[#allocation7 + $0x8] sm:$0xf]
        %v659 = vld [vmem:[#allocation7 + $0xc] sm:$0xf]
        %v660 = vld [vmem:[#allocation7 + $0x10] sm:$0xf]
        %v661 = vld [vmem:[#allocation7 + $0x14] sm:$0xf]
        %v662 = vld [vmem:[#allocation7 + $0x18] sm:$0xf]
        %v663 = vld [vmem:[#allocation7 + $0x1c] sm:$0xf]
        %s664 = scalar_lea.vmem [#allocation7], 32
        %v665 = vld [vmem:[%s664] sm:$0xf]
        %v666 = vld [vmem:[%s664 + $0x4] sm:$0xf]
        %v667 = vld [vmem:[%s664 + $0x8] sm:$0xf]
        %v668 = vld [vmem:[%s664 + $0xc] sm:$0xf]
        %v669 = vld [vmem:[%s664 + $0x10] sm:$0xf]
        %v670 = vld [vmem:[%s664 + $0x14] sm:$0xf]
        %v671 = vld [vmem:[%s664 + $0x18] sm:$0xf]
        %v672 = vld [vmem:[%s664 + $0x1c] sm:$0xf]
        %v681 = vunpack.c.l.b16 %v665
        %v682 = vunpack.c.l.b16 %v666
        %v683 = vunpack.c.l.b16 %v667
        %v684 = vunpack.c.l.b16 %v668
        %v685 = vunpack.c.l.b16 %v669
        %v686 = vunpack.c.l.b16 %v670
        %v687 = vunpack.c.l.b16 %v671
        %v688 = vunpack.c.l.b16 %v672
        %v689 = vpack.c.b16 %v682, %v681
        %v690 = vpack.c.b16 %v684, %v683
        %v691 = vpack.c.b16 %v686, %v685
        %v692 = vpack.c.b16 %v688, %v687
        %vm697 = vcmask 523264
        %v699 = vsel %vm697, %v645, 0
        %701 = vmatprep.subr.bf16.mxu0 0
        %702 = vmatpush1.bf16.msra.mxu0 %v689
        %703 = vmatprep.subr.bf16.mxu0 0
        %704 = vmatpush1.bf16.msra.mxu0 %v690
        %705 = vmatprep.subr.bf16.mxu0 0
        %706 = vmatpush1.bf16.msra.mxu0 %v691
        %707 = vmatprep.subr.bf16.mxu0 0
        %708 = vmatpush1.bf16.msra.mxu0 %v692
        %709 = vmatprep.subr.bf16.mxu0 0
        %710 = vmatpush1.bf16.msra.mxu0 0
        %711 = vmatprep.subr.bf16.mxu0 0
        %712 = vmatpush1.bf16.msra.mxu0 0
        %713 = vmatprep.subr.bf16.mxu0 0
        %714 = vmatpush1.bf16.msra.mxu0 0
        %715 = vmatprep.subr.bf16.mxu0 0
        %716 = vmatpush1.bf16.msra.mxu0 0
        %717 = vmatprep.subr.bf16.mxu0 0
        %718 = vmatpush1.bf16.msra.mxu0 0
        %719 = vmatprep.subr.bf16.mxu0 0
        %720 = vmatpush1.bf16.msra.mxu0 0
        %721 = vmatprep.subr.bf16.mxu0 0
        %722 = vmatpush1.bf16.msra.mxu0 0
        %723 = vmatprep.subr.bf16.mxu0 0
        %724 = vmatpush1.bf16.msra.mxu0 0
        %725 = vmatprep.subr.bf16.mxu0 0
        %726 = vmatpush1.bf16.msra.mxu0 0
        %727 = vmatprep.subr.bf16.mxu0 0
        %728 = vmatpush1.bf16.msra.mxu0 0
        %729 = vmatprep.subr.bf16.mxu0 0
        %730 = vmatpush1.bf16.msra.mxu0 0
        %731 = vmatprep.subr.bf16.mxu0 0
        %732 = vmatpush1.bf16.msra.mxu0 0
        %733 = vmatprep.mubr.bf16.mxu0 0
        %734 = vmatmul.mubr.bf16.gmra.mrb[0].mxu0 %v699
        %v735 = vpop.f32.mrb[0].mxu0
        %v736 = vadd.f32 0.0, %v735
        %v737 = vpop.f32.mrb[0].mxu0
        %v738 = vpop.f32.mrb[0].mxu0
        %v739 = vadd.f32 0.0, %v738
        %v740 = vpop.f32.mrb[0].mxu0
        %741 = vdwg.mxu0
        %v750 = vunpack.c.l.b16 %v656
        %v751 = vunpack.c.l.b16 %v657
        %v752 = vunpack.c.l.b16 %v658
        %v753 = vunpack.c.l.b16 %v659
        %v754 = vunpack.c.l.b16 %v660
        %v755 = vunpack.c.l.b16 %v661
        %v756 = vunpack.c.l.b16 %v662
        %v757 = vunpack.c.l.b16 %v663
        %v758 = vpack.c.b16 %v751, %v750
        %v759 = vpack.c.b16 %v753, %v752
        %v760 = vpack.c.b16 %v755, %v754
        %v761 = vpack.c.b16 %v757, %v756
        %v767 = vsel %vm697, %v644, 0
        %769 = vmatprep.subr.bf16.mxu0 0
        %770 = vmatpush1.bf16.msra.mxu0 %v758
        %771 = vmatprep.subr.bf16.mxu0 0
        %772 = vmatpush1.bf16.msra.mxu0 %v759
        %773 = vmatprep.subr.bf16.mxu0 0
        %774 = vmatpush1.bf16.msra.mxu0 %v760
        %775 = vmatprep.subr.bf16.mxu0 0
        %776 = vmatpush1.bf16.msra.mxu0 %v761
        %777 = vmatprep.subr.bf16.mxu0 0
        %778 = vmatpush1.bf16.msra.mxu0 0
        %779 = vmatprep.subr.bf16.mxu0 0
        %780 = vmatpush1.bf16.msra.mxu0 0
        %781 = vmatprep.subr.bf16.mxu0 0
        %782 = vmatpush1.bf16.msra.mxu0 0
        %783 = vmatprep.subr.bf16.mxu0 0
        %784 = vmatpush1.bf16.msra.mxu0 0
        %785 = vmatprep.subr.bf16.mxu0 0
        %786 = vmatpush1.bf16.msra.mxu0 0
        %787 = vmatprep.subr.bf16.mxu0 0
        %788 = vmatpush1.bf16.msra.mxu0 0
        %789 = vmatprep.subr.bf16.mxu0 0
        %790 = vmatpush1.bf16.msra.mxu0 0
        %791 = vmatprep.subr.bf16.mxu0 0
        %792 = vmatpush1.bf16.msra.mxu0 0
        %793 = vmatprep.subr.bf16.mxu0 0
        %794 = vmatpush1.bf16.msra.mxu0 0
        %795 = vmatprep.subr.bf16.mxu0 0
        %796 = vmatpush1.bf16.msra.mxu0 0
        %797 = vmatprep.subr.bf16.mxu0 0
        %798 = vmatpush1.bf16.msra.mxu0 0
        %799 = vmatprep.subr.bf16.mxu0 0
        %800 = vmatpush1.bf16.msra.mxu0 0
        %801 = vmatprep.mubr.bf16.mxu0 0
        %802 = vmatmul.mubr.bf16.gmra.mrb[0].mxu0 %v767
        %v803 = vpop.f32.mrb[0].mxu0
        %v804 = vadd.f32 %v736, %v803
        %v805 = vpop.f32.mrb[0].mxu0
        %v806 = vpop.f32.mrb[0].mxu0
        %v807 = vadd.f32 %v739, %v806
        %v808 = vpop.f32.mrb[0].mxu0
        %809 = vdwg.mxu0
        %s810 = scalar_lea.vmem [#allocation7], 64
        %v811 = vld [vmem:[%s810] sm:$0xf]
        %v812 = vld [vmem:[%s810 + $0x4] sm:$0xf]
        %v813 = vld [vmem:[%s810 + $0x8] sm:$0xf]
        %v814 = vld [vmem:[%s810 + $0xc] sm:$0xf]
        %v815 = vld [vmem:[%s810 + $0x10] sm:$0xf]
        %v816 = vld [vmem:[%s810 + $0x14] sm:$0xf]
        %v817 = vld [vmem:[%s810 + $0x18] sm:$0xf]
        %v818 = vld [vmem:[%s810 + $0x1c] sm:$0xf]
        %v827 = vunpack.c.l.b16 %v811
        %v828 = vunpack.c.l.b16 %v812
        %v829 = vunpack.c.l.b16 %v813
        %v830 = vunpack.c.l.b16 %v814
        %v831 = vunpack.c.l.b16 %v815
        %v832 = vunpack.c.l.b16 %v816
        %v833 = vunpack.c.l.b16 %v817
        %v834 = vunpack.c.l.b16 %v818
        %v835 = vpack.c.b16 %v828, %v827
        %v836 = vpack.c.b16 %v830, %v829
        %v837 = vpack.c.b16 %v832, %v831
        %v838 = vpack.c.b16 %v834, %v833
        %v844 = vsel %vm697, %v655, 0
        %846 = vmatprep.subr.bf16.mxu0 0
        %847 = vmatpush1.bf16.msra.mxu0 %v835
        %848 = vmatprep.subr.bf16.mxu0 0
        %849 = vmatpush1.bf16.msra.mxu0 %v836
        %850 = vmatprep.subr.bf16.mxu0 0
        %851 = vmatpush1.bf16.msra.mxu0 %v837
        %852 = vmatprep.subr.bf16.mxu0 0
        %853 = vmatpush1.bf16.msra.mxu0 %v838
        %854 = vmatprep.subr.bf16.mxu0 0
        %855 = vmatpush1.bf16.msra.mxu0 0
        %856 = vmatprep.subr.bf16.mxu0 0
        %857 = vmatpush1.bf16.msra.mxu0 0
        %858 = vmatprep.subr.bf16.mxu0 0
        %859 = vmatpush1.bf16.msra.mxu0 0
        %860 = vmatprep.subr.bf16.mxu0 0
        %861 = vmatpush1.bf16.msra.mxu0 0
        %862 = vmatprep.subr.bf16.mxu0 0
        %863 = vmatpush1.bf16.msra.mxu0 0
        %864 = vmatprep.subr.bf16.mxu0 0
        %865 = vmatpush1.bf16.msra.mxu0 0
        %866 = vmatprep.subr.bf16.mxu0 0
        %867 = vmatpush1.bf16.msra.mxu0 0
        %868 = vmatprep.subr.bf16.mxu0 0
        %869 = vmatpush1.bf16.msra.mxu0 0
        %870 = vmatprep.subr.bf16.mxu0 0
        %871 = vmatpush1.bf16.msra.mxu0 0
        %872 = vmatprep.subr.bf16.mxu0 0
        %873 = vmatpush1.bf16.msra.mxu0 0
        %874 = vmatprep.subr.bf16.mxu0 0
        %875 = vmatpush1.bf16.msra.mxu0 0
        %876 = vmatprep.subr.bf16.mxu0 0
        %877 = vmatpush1.bf16.msra.mxu0 0
        %878 = vmatprep.mubr.bf16.mxu0 0
        %879 = vmatmul.mubr.bf16.gmra.mrb[0].mxu0 %v844
        %v880 = vpop.f32.mrb[0].mxu0
        %v881 = vadd.f32 0.0, %v880
        %v882 = vpop.f32.mrb[0].mxu0
        %v883 = vpop.f32.mrb[0].mxu0
        %v884 = vadd.f32 0.0, %v883
        %v885 = vpop.f32.mrb[0].mxu0
        %886 = vdwg.mxu0
        %v887 = vadd.f32 %v804, %v881
        %v888 = vadd.f32 %v807, %v884
        %v889 = vld [vmem:[%s7] sm:$0x1]
        %v891 = vlaneseq
        %v892 = vshrl.u32 %v891, 7
        %v893 = vsub.s32 0, %v892
        %v894 = vrot.slane %v889, %v893
        %v896 = vadd.f32 %v887, %v894
        %v897 = vadd.f32 %v888, %v894
        %v898 = vmax.f32 %v896, 0.0
        %v899 = vmax.f32 %v897, 0.0
        %v900 = vrot.slane %v898, 7
        %v901 = vrot.slane %v899, 7
        %v902 = vsel %vm639, %v900, %v901
        %v903 = vsel %vm639, %v901, %v900
        %v904 = vsel %vm635, 0.0, %v903
        %v905 = vsel %vm636, 0.0, %v902
        %v906 = vpack.c.bf16 %v905, %v904
        %v907 = vpack.c.bf16 %v899, %v898
        %v908 = vrot.slane %v898, 1
        %v909 = vrot.slane %v899, 1
        %v910 = vsel %vm650, %v908, %v909
        %v911 = vsel %vm650, %v909, %v908
        %v912 = vsel %vm646, 0.0, %v910
        %v913 = vsel %vm647, 0.0, %v911
        %v914 = vpack.c.bf16 %v913, %v912
        %v915 = vld [vmem:[#allocation8] sm:$0xf]
        %v916 = vld [vmem:[#allocation8 + $0x4] sm:$0xf]
        %v917 = vld [vmem:[#allocation8 + $0x8] sm:$0xf]
        %v918 = vld [vmem:[#allocation8 + $0xc] sm:$0xf]
        %v919 = vld [vmem:[#allocation8 + $0x10] sm:$0xf]
        %v920 = vld [vmem:[#allocation8 + $0x14] sm:$0xf]
        %v921 = vld [vmem:[#allocation8 + $0x18] sm:$0xf]
        %v922 = vld [vmem:[#allocation8 + $0x1c] sm:$0xf]
        %v923 = vld [vmem:[#allocation8 + $0x20] sm:$0xf]
        %v924 = vld [vmem:[#allocation8 + $0x24] sm:$0xf]
        %v925 = vld [vmem:[#allocation8 + $0x28] sm:$0xf]
        %v926 = vld [vmem:[#allocation8 + $0x2c] sm:$0xf]
        %v927 = vld [vmem:[#allocation8 + $0x30] sm:$0xf]
        %v928 = vld [vmem:[#allocation8 + $0x34] sm:$0xf]
        %v929 = vld [vmem:[#allocation8 + $0x38] sm:$0xf]
        %v930 = vld [vmem:[#allocation8 + $0x3c] sm:$0xf]
        %s931 = scalar_lea.vmem [#allocation8], 64
        %v932 = vld [vmem:[%s931] sm:$0xf]
        %v933 = vld [vmem:[%s931 + $0x4] sm:$0xf]
        %v934 = vld [vmem:[%s931 + $0x8] sm:$0xf]
        %v935 = vld [vmem:[%s931 + $0xc] sm:$0xf]
        %v936 = vld [vmem:[%s931 + $0x10] sm:$0xf]
        %v937 = vld [vmem:[%s931 + $0x14] sm:$0xf]
        %v938 = vld [vmem:[%s931 + $0x18] sm:$0xf]
        %v939 = vld [vmem:[%s931 + $0x1c] sm:$0xf]
        %v940 = vld [vmem:[%s931 + $0x20] sm:$0xf]
        %v941 = vld [vmem:[%s931 + $0x24] sm:$0xf]
        %v942 = vld [vmem:[%s931 + $0x28] sm:$0xf]
        %v943 = vld [vmem:[%s931 + $0x2c] sm:$0xf]
        %v944 = vld [vmem:[%s931 + $0x30] sm:$0xf]
        %v945 = vld [vmem:[%s931 + $0x34] sm:$0xf]
        %v946 = vld [vmem:[%s931 + $0x38] sm:$0xf]
        %v947 = vld [vmem:[%s931 + $0x3c] sm:$0xf]
        %v964 = vunpack.c.l.b16 %v932
        %v965 = vunpack.c.l.b16 %v933
        %v966 = vunpack.c.l.b16 %v934
        %v967 = vunpack.c.l.b16 %v935
        %v968 = vunpack.c.l.b16 %v936
        %v969 = vunpack.c.l.b16 %v937
        %v970 = vunpack.c.l.b16 %v938
        %v971 = vunpack.c.l.b16 %v939
        %v972 = vunpack.c.l.b16 %v940
        %v973 = vunpack.c.l.b16 %v941
        %v974 = vunpack.c.l.b16 %v942
        %v975 = vunpack.c.l.b16 %v943
        %v976 = vunpack.c.l.b16 %v944
        %v977 = vunpack.c.l.b16 %v945
        %v978 = vunpack.c.l.b16 %v946
        %v979 = vunpack.c.l.b16 %v947
        %v980 = vpack.c.b16 %v965, %v964
        %v981 = vpack.c.b16 %v967, %v966
        %v982 = vpack.c.b16 %v969, %v968
        %v983 = vpack.c.b16 %v971, %v970
        %v984 = vpack.c.b16 %v973, %v972
        %v985 = vpack.c.b16 %v975, %v974
        %v986 = vpack.c.b16 %v977, %v976
        %v987 = vpack.c.b16 %v979, %v978
        %996 = vmatprep.subr.bf16.mxu0 0
        %997 = vmatpush1.bf16.msra.mxu0 %v980
        %998 = vmatprep.subr.bf16.mxu0 0
        %999 = vmatpush1.bf16.msra.mxu0 %v981
        %1000 = vmatprep.subr.bf16.mxu0 0
        %1001 = vmatpush1.bf16.msra.mxu0 %v982
        %1002 = vmatprep.subr.bf16.mxu0 0
        %1003 = vmatpush1.bf16.msra.mxu0 %v983
        %1004 = vmatprep.subr.bf16.mxu0 0
        %1005 = vmatpush1.bf16.msra.mxu0 %v984
        %1006 = vmatprep.subr.bf16.mxu0 0
        %1007 = vmatpush1.bf16.msra.mxu0 %v985
        %1008 = vmatprep.subr.bf16.mxu0 0
        %1009 = vmatpush1.bf16.msra.mxu0 %v986
        %1010 = vmatprep.subr.bf16.mxu0 0
        %1011 = vmatpush1.bf16.msra.mxu0 %v987
        %1012 = vmatprep.subr.bf16.mxu0 0
        %1013 = vmatpush1.bf16.msra.mxu0 0
        %1014 = vmatprep.subr.bf16.mxu0 0
        %1015 = vmatpush1.bf16.msra.mxu0 0
        %1016 = vmatprep.subr.bf16.mxu0 0
        %1017 = vmatpush1.bf16.msra.mxu0 0
        %1018 = vmatprep.subr.bf16.mxu0 0
        %1019 = vmatpush1.bf16.msra.mxu0 0
        %1020 = vmatprep.subr.bf16.mxu0 0
        %1021 = vmatpush1.bf16.msra.mxu0 0
        %1022 = vmatprep.subr.bf16.mxu0 0
        %1023 = vmatpush1.bf16.msra.mxu0 0
        %1024 = vmatprep.subr.bf16.mxu0 0
        %1025 = vmatpush1.bf16.msra.mxu0 0
        %1026 = vmatprep.subr.bf16.mxu0 0
        %1027 = vmatpush1.bf16.msra.mxu0 0
        %1028 = vmatprep.mubr.bf16.mxu0 0
        %1029 = vmatmul.mubr.bf16.gmra.mrb[0].mxu0 %v907
        %v1030 = vpop.f32.mrb[0].mxu0
        %v1031 = vadd.f32 0.0, %v1030
        %v1032 = vpop.f32.mrb[0].mxu0
        %v1033 = vpop.f32.mrb[0].mxu0
        %v1034 = vadd.f32 0.0, %v1033
        %v1035 = vpop.f32.mrb[0].mxu0
        %1036 = vdwg.mxu0
        %v1053 = vunpack.c.l.b16 %v915
        %v1054 = vunpack.c.l.b16 %v916
        %v1055 = vunpack.c.l.b16 %v917
        %v1056 = vunpack.c.l.b16 %v918
        %v1057 = vunpack.c.l.b16 %v919
        %v1058 = vunpack.c.l.b16 %v920
        %v1059 = vunpack.c.l.b16 %v921
        %v1060 = vunpack.c.l.b16 %v922
        %v1061 = vunpack.c.l.b16 %v923
        %v1062 = vunpack.c.l.b16 %v924
        %v1063 = vunpack.c.l.b16 %v925
        %v1064 = vunpack.c.l.b16 %v926
        %v1065 = vunpack.c.l.b16 %v927
        %v1066 = vunpack.c.l.b16 %v928
        %v1067 = vunpack.c.l.b16 %v929
        %v1068 = vunpack.c.l.b16 %v930
        %v1069 = vpack.c.b16 %v1054, %v1053
        %v1070 = vpack.c.b16 %v1056, %v1055
        %v1071 = vpack.c.b16 %v1058, %v1057
        %v1072 = vpack.c.b16 %v1060, %v1059
        %v1073 = vpack.c.b16 %v1062, %v1061
        %v1074 = vpack.c.b16 %v1064, %v1063
        %v1075 = vpack.c.b16 %v1066, %v1065
        %v1076 = vpack.c.b16 %v1068, %v1067
        %1085 = vmatprep.subr.bf16.mxu0 0
        %1086 = vmatpush1.bf16.msra.mxu0 %v1069
        %1087 = vmatprep.subr.bf16.mxu0 0
        %1088 = vmatpush1.bf16.msra.mxu0 %v1070
        %1089 = vmatprep.subr.bf16.mxu0 0
        %1090 = vmatpush1.bf16.msra.mxu0 %v1071
        %1091 = vmatprep.subr.bf16.mxu0 0
        %1092 = vmatpush1.bf16.msra.mxu0 %v1072
        %1093 = vmatprep.subr.bf16.mxu0 0
        %1094 = vmatpush1.bf16.msra.mxu0 %v1073
        %1095 = vmatprep.subr.bf16.mxu0 0
        %1096 = vmatpush1.bf16.msra.mxu0 %v1074
        %1097 = vmatprep.subr.bf16.mxu0 0
        %1098 = vmatpush1.bf16.msra.mxu0 %v1075
        %1099 = vmatprep.subr.bf16.mxu0 0
        %1100 = vmatpush1.bf16.msra.mxu0 %v1076
        %1101 = vmatprep.subr.bf16.mxu0 0
        %1102 = vmatpush1.bf16.msra.mxu0 0
        %1103 = vmatprep.subr.bf16.mxu0 0
        %1104 = vmatpush1.bf16.msra.mxu0 0
        %1105 = vmatprep.subr.bf16.mxu0 0
        %1106 = vmatpush1.bf16.msra.mxu0 0
        %1107 = vmatprep.subr.bf16.mxu0 0
        %1108 = vmatpush1.bf16.msra.mxu0 0
        %1109 = vmatprep.subr.bf16.mxu0 0
        %1110 = vmatpush1.bf16.msra.mxu0 0
        %1111 = vmatprep.subr.bf16.mxu0 0
        %1112 = vmatpush1.bf16.msra.mxu0 0
        %1113 = vmatprep.subr.bf16.mxu0 0
        %1114 = vmatpush1.bf16.msra.mxu0 0
        %1115 = vmatprep.subr.bf16.mxu0 0
        %1116 = vmatpush1.bf16.msra.mxu0 0
        %1117 = vmatprep.mubr.bf16.mxu0 0
        %1118 = vmatmul.mubr.bf16.gmra.mrb[0].mxu0 %v906
        %v1119 = vpop.f32.mrb[0].mxu0
        %v1120 = vadd.f32 %v1031, %v1119
        %v1121 = vpop.f32.mrb[0].mxu0
        %v1122 = vpop.f32.mrb[0].mxu0
        %v1123 = vadd.f32 %v1034, %v1122
        %v1124 = vpop.f32.mrb[0].mxu0
        %1125 = vdwg.mxu0
        %s1126 = scalar_lea.vmem [#allocation8], 128
        %v1127 = vld [vmem:[%s1126] sm:$0xf]
        %v1128 = vld [vmem:[%s1126 + $0x4] sm:$0xf]
        %v1129 = vld [vmem:[%s1126 + $0x8] sm:$0xf]
        %v1130 = vld [vmem:[%s1126 + $0xc] sm:$0xf]
        %v1131 = vld [vmem:[%s1126 + $0x10] sm:$0xf]
        %v1132 = vld [vmem:[%s1126 + $0x14] sm:$0xf]
        %v1133 = vld [vmem:[%s1126 + $0x18] sm:$0xf]
        %v1134 = vld [vmem:[%s1126 + $0x1c] sm:$0xf]
        %v1135 = vld [vmem:[%s1126 + $0x20] sm:$0xf]
        %v1136 = vld [vmem:[%s1126 + $0x24] sm:$0xf]
        %v1137 = vld [vmem:[%s1126 + $0x28] sm:$0xf]
        %v1138 = vld [vmem:[%s1126 + $0x2c] sm:$0xf]
        %v1139 = vld [vmem:[%s1126 + $0x30] sm:$0xf]
        %v1140 = vld [vmem:[%s1126 + $0x34] sm:$0xf]
        %v1141 = vld [vmem:[%s1126 + $0x38] sm:$0xf]
        %v1142 = vld [vmem:[%s1126 + $0x3c] sm:$0xf]
        %v1159 = vunpack.c.l.b16 %v1127
        %v1160 = vunpack.c.l.b16 %v1128
        %v1161 = vunpack.c.l.b16 %v1129
        %v1162 = vunpack.c.l.b16 %v1130
        %v1163 = vunpack.c.l.b16 %v1131
        %v1164 = vunpack.c.l.b16 %v1132
        %v1165 = vunpack.c.l.b16 %v1133
        %v1166 = vunpack.c.l.b16 %v1134
        %v1167 = vunpack.c.l.b16 %v1135
        %v1168 = vunpack.c.l.b16 %v1136
        %v1169 = vunpack.c.l.b16 %v1137
        %v1170 = vunpack.c.l.b16 %v1138
        %v1171 = vunpack.c.l.b16 %v1139
        %v1172 = vunpack.c.l.b16 %v1140
        %v1173 = vunpack.c.l.b16 %v1141
        %v1174 = vunpack.c.l.b16 %v1142
        %v1175 = vpack.c.b16 %v1160, %v1159
        %v1176 = vpack.c.b16 %v1162, %v1161
        %v1177 = vpack.c.b16 %v1164, %v1163
        %v1178 = vpack.c.b16 %v1166, %v1165
        %v1179 = vpack.c.b16 %v1168, %v1167
        %v1180 = vpack.c.b16 %v1170, %v1169
        %v1181 = vpack.c.b16 %v1172, %v1171
        %v1182 = vpack.c.b16 %v1174, %v1173
        %1191 = vmatprep.subr.bf16.mxu0 0
        %1192 = vmatpush1.bf16.msra.mxu0 %v1175
        %1193 = vmatprep.subr.bf16.mxu0 0
        %1194 = vmatpush1.bf16.msra.mxu0 %v1176
        %1195 = vmatprep.subr.bf16.mxu0 0
        %1196 = vmatpush1.bf16.msra.mxu0 %v1177
        %1197 = vmatprep.subr.bf16.mxu0 0
        %1198 = vmatpush1.bf16.msra.mxu0 %v1178
        %1199 = vmatprep.subr.bf16.mxu0 0
        %1200 = vmatpush1.bf16.msra.mxu0 %v1179
        %1201 = vmatprep.subr.bf16.mxu0 0
        %1202 = vmatpush1.bf16.msra.mxu0 %v1180
        %1203 = vmatprep.subr.bf16.mxu0 0
        %1204 = vmatpush1.bf16.msra.mxu0 %v1181
        %1205 = vmatprep.subr.bf16.mxu0 0
        %1206 = vmatpush1.bf16.msra.mxu0 %v1182
        %1207 = vmatprep.subr.bf16.mxu0 0
        %1208 = vmatpush1.bf16.msra.mxu0 0
        %1209 = vmatprep.subr.bf16.mxu0 0
        %1210 = vmatpush1.bf16.msra.mxu0 0
        %1211 = vmatprep.subr.bf16.mxu0 0
        %1212 = vmatpush1.bf16.msra.mxu0 0
        %1213 = vmatprep.subr.bf16.mxu0 0
        %1214 = vmatpush1.bf16.msra.mxu0 0
        %1215 = vmatprep.subr.bf16.mxu0 0
        %1216 = vmatpush1.bf16.msra.mxu0 0
        %1217 = vmatprep.subr.bf16.mxu0 0
        %1218 = vmatpush1.bf16.msra.mxu0 0
        %1219 = vmatprep.subr.bf16.mxu0 0
        %1220 = vmatpush1.bf16.msra.mxu0 0
        %1221 = vmatprep.subr.bf16.mxu0 0
        %1222 = vmatpush1.bf16.msra.mxu0 0
        %1223 = vmatprep.mubr.bf16.mxu0 0
        %1224 = vmatmul.mubr.bf16.gmra.mrb[0].mxu0 %v914
        %v1225 = vpop.f32.mrb[0].mxu0
        %v1226 = vadd.f32 0.0, %v1225
        %v1227 = vpop.f32.mrb[0].mxu0
        %v1228 = vpop.f32.mrb[0].mxu0
        %v1229 = vadd.f32 0.0, %v1228
        %v1230 = vpop.f32.mrb[0].mxu0
        %1231 = vdwg.mxu0
        %v1232 = vadd.f32 %v1120, %v1226
        %v1233 = vadd.f32 %v1123, %v1229
        %v1234 = vld [vmem:[%s8] sm:$0x1]
        %v1236 = vlaneseq
        %v1237 = vshrl.u32 %v1236, 7
        %v1238 = vsub.s32 0, %v1237
        %v1239 = vrot.slane %v1234, %v1238
        %v1241 = vadd.f32 %v1232, %v1239
        %v1242 = vadd.f32 %v1233, %v1239
        %v1243 = vmax.f32 %v1241, 0.0
        %v1244 = vmax.f32 %v1242, 0.0
        %v1245 = vrot.slane %v1243, 7
        %v1246 = vrot.slane %v1244, 7
        %v1247 = vsel %vm639, %v1245, %v1246
        %v1248 = vsel %vm639, %v1246, %v1245
        %v1249 = vsel %vm635, 0.0, %v1248
        %v1250 = vsel %vm636, 0.0, %v1247
        %v1251 = vpack.c.bf16 %v1250, %v1249
        %v1252 = vpack.c.bf16 %v1244, %v1243
        %v1253 = vrot.slane %v1243, 1
        %v1254 = vrot.slane %v1244, 1
        %v1255 = vsel %vm650, %v1253, %v1254
        %v1256 = vsel %vm650, %v1254, %v1253
        %v1257 = vsel %vm646, 0.0, %v1255
        %v1258 = vsel %vm647, 0.0, %v1256
        %v1259 = vpack.c.bf16 %v1258, %v1257
        %v1260 = vld [vmem:[#allocation10] sm:$0xf]
        %v1261 = vld [vmem:[#allocation10 + $0x4] sm:$0xf]
        %v1262 = vld [vmem:[#allocation10 + $0x8] sm:$0xf]
        %v1263 = vld [vmem:[#allocation10 + $0xc] sm:$0xf]
        %v1264 = vld [vmem:[#allocation10 + $0x10] sm:$0xf]
        %v1265 = vld [vmem:[#allocation10 + $0x14] sm:$0xf]
        %v1266 = vld [vmem:[#allocation10 + $0x18] sm:$0xf]
        %v1267 = vld [vmem:[#allocation10 + $0x1c] sm:$0xf]
        %v1268 = vld [vmem:[#allocation10 + $0x20] sm:$0xf]
        %v1269 = vld [vmem:[#allocation10 + $0x24] sm:$0xf]
        %v1270 = vld [vmem:[#allocation10 + $0x28] sm:$0xf]
        %v1271 = vld [vmem:[#allocation10 + $0x2c] sm:$0xf]
        %v1272 = vld [vmem:[#allocation10 + $0x30] sm:$0xf]
        %v1273 = vld [vmem:[#allocation10 + $0x34] sm:$0xf]
        %v1274 = vld [vmem:[#allocation10 + $0x38] sm:$0xf]
        %v1275 = vld [vmem:[#allocation10 + $0x3c] sm:$0xf]
        %s1276 = scalar_lea.vmem [#allocation10], 64
        %v1277 = vld [vmem:[%s1276] sm:$0xf]
        %v1278 = vld [vmem:[%s1276 + $0x4] sm:$0xf]
        %v1279 = vld [vmem:[%s1276 + $0x8] sm:$0xf]
        %v1280 = vld [vmem:[%s1276 + $0xc] sm:$0xf]
        %v1281 = vld [vmem:[%s1276 + $0x10] sm:$0xf]
        %v1282 = vld [vmem:[%s1276 + $0x14] sm:$0xf]
        %v1283 = vld [vmem:[%s1276 + $0x18] sm:$0xf]
        %v1284 = vld [vmem:[%s1276 + $0x1c] sm:$0xf]
        %v1285 = vld [vmem:[%s1276 + $0x20] sm:$0xf]
        %v1286 = vld [vmem:[%s1276 + $0x24] sm:$0xf]
        %v1287 = vld [vmem:[%s1276 + $0x28] sm:$0xf]
        %v1288 = vld [vmem:[%s1276 + $0x2c] sm:$0xf]
        %v1289 = vld [vmem:[%s1276 + $0x30] sm:$0xf]
        %v1290 = vld [vmem:[%s1276 + $0x34] sm:$0xf]
        %v1291 = vld [vmem:[%s1276 + $0x38] sm:$0xf]
        %v1292 = vld [vmem:[%s1276 + $0x3c] sm:$0xf]
        %v1309 = vunpack.c.l.b16 %v1277
        %v1310 = vunpack.c.l.b16 %v1278
        %v1311 = vunpack.c.l.b16 %v1279
        %v1312 = vunpack.c.l.b16 %v1280
        %v1313 = vunpack.c.l.b16 %v1281
        %v1314 = vunpack.c.l.b16 %v1282
        %v1315 = vunpack.c.l.b16 %v1283
        %v1316 = vunpack.c.l.b16 %v1284
        %v1317 = vunpack.c.l.b16 %v1285
        %v1318 = vunpack.c.l.b16 %v1286
        %v1319 = vunpack.c.l.b16 %v1287
        %v1320 = vunpack.c.l.b16 %v1288
        %v1321 = vunpack.c.l.b16 %v1289
        %v1322 = vunpack.c.l.b16 %v1290
        %v1323 = vunpack.c.l.b16 %v1291
        %v1324 = vunpack.c.l.b16 %v1292
        %v1325 = vpack.c.b16 %v1310, %v1309
        %v1326 = vpack.c.b16 %v1312, %v1311
        %v1327 = vpack.c.b16 %v1314, %v1313
        %v1328 = vpack.c.b16 %v1316, %v1315
        %v1329 = vpack.c.b16 %v1318, %v1317
        %v1330 = vpack.c.b16 %v1320, %v1319
        %v1331 = vpack.c.b16 %v1322, %v1321
        %v1332 = vpack.c.b16 %v1324, %v1323
        %1341 = vmatprep.subr.bf16.mxu0 0
        %1342 = vmatpush1.bf16.msra.mxu0 %v1325
        %1343 = vmatprep.subr.bf16.mxu0 0
        %1344 = vmatpush1.bf16.msra.mxu0 %v1326
        %1345 = vmatprep.subr.bf16.mxu0 0
        %1346 = vmatpush1.bf16.msra.mxu0 %v1327
        %1347 = vmatprep.subr.bf16.mxu0 0
        %1348 = vmatpush1.bf16.msra.mxu0 %v1328
        %1349 = vmatprep.subr.bf16.mxu0 0
        %1350 = vmatpush1.bf16.msra.mxu0 %v1329
        %1351 = vmatprep.subr.bf16.mxu0 0
        %1352 = vmatpush1.bf16.msra.mxu0 %v1330
        %1353 = vmatprep.subr.bf16.mxu0 0
        %1354 = vmatpush1.bf16.msra.mxu0 %v1331
        %1355 = vmatprep.subr.bf16.mxu0 0
        %1356 = vmatpush1.bf16.msra.mxu0 %v1332
        %1357 = vmatprep.subr.bf16.mxu0 0
        %1358 = vmatpush1.bf16.msra.mxu0 0
        %1359 = vmatprep.subr.bf16.mxu0 0
        %1360 = vmatpush1.bf16.msra.mxu0 0
        %1361 = vmatprep.subr.bf16.mxu0 0
        %1362 = vmatpush1.bf16.msra.mxu0 0
        %1363 = vmatprep.subr.bf16.mxu0 0
        %1364 = vmatpush1.bf16.msra.mxu0 0
        %1365 = vmatprep.subr.bf16.mxu0 0
        %1366 = vmatpush1.bf16.msra.mxu0 0
        %1367 = vmatprep.subr.bf16.mxu0 0
        %1368 = vmatpush1.bf16.msra.mxu0 0
        %1369 = vmatprep.subr.bf16.mxu0 0
        %1370 = vmatpush1.bf16.msra.mxu0 0
        %1371 = vmatprep.subr.bf16.mxu0 0
        %1372 = vmatpush1.bf16.msra.mxu0 0
        %1373 = vmatprep.mubr.bf16.mxu0 0
        %1374 = vmatmul.mubr.bf16.gmra.mrb[0].mxu0 %v1252
        %v1375 = vpop.f32.mrb[0].mxu0
        %v1376 = vadd.f32 0.0, %v1375
        %v1377 = vpop.f32.mrb[0].mxu0
        %v1378 = vpop.f32.mrb[0].mxu0
        %v1379 = vadd.f32 0.0, %v1378
        %v1380 = vpop.f32.mrb[0].mxu0
        %1381 = vdwg.mxu0
        %v1398 = vunpack.c.l.b16 %v1260
        %v1399 = vunpack.c.l.b16 %v1261
        %v1400 = vunpack.c.l.b16 %v1262
        %v1401 = vunpack.c.l.b16 %v1263
        %v1402 = vunpack.c.l.b16 %v1264
        %v1403 = vunpack.c.l.b16 %v1265
        %v1404 = vunpack.c.l.b16 %v1266
        %v1405 = vunpack.c.l.b16 %v1267
        %v1406 = vunpack.c.l.b16 %v1268
        %v1407 = vunpack.c.l.b16 %v1269
        %v1408 = vunpack.c.l.b16 %v1270
        %v1409 = vunpack.c.l.b16 %v1271
        %v1410 = vunpack.c.l.b16 %v1272
        %v1411 = vunpack.c.l.b16 %v1273
        %v1412 = vunpack.c.l.b16 %v1274
        %v1413 = vunpack.c.l.b16 %v1275
        %v1414 = vpack.c.b16 %v1399, %v1398
        %v1415 = vpack.c.b16 %v1401, %v1400
        %v1416 = vpack.c.b16 %v1403, %v1402
        %v1417 = vpack.c.b16 %v1405, %v1404
        %v1418 = vpack.c.b16 %v1407, %v1406
        %v1419 = vpack.c.b16 %v1409, %v1408
        %v1420 = vpack.c.b16 %v1411, %v1410
        %v1421 = vpack.c.b16 %v1413, %v1412
        %1430 = vmatprep.subr.bf16.mxu0 0
        %1431 = vmatpush1.bf16.msra.mxu0 %v1414
        %1432 = vmatprep.subr.bf16.mxu0 0
        %1433 = vmatpush1.bf16.msra.mxu0 %v1415
        %1434 = vmatprep.subr.bf16.mxu0 0
        %1435 = vmatpush1.bf16.msra.mxu0 %v1416
        %1436 = vmatprep.subr.bf16.mxu0 0
        %1437 = vmatpush1.bf16.msra.mxu0 %v1417
        %1438 = vmatprep.subr.bf16.mxu0 0
        %1439 = vmatpush1.bf16.msra.mxu0 %v1418
        %1440 = vmatprep.subr.bf16.mxu0 0
        %1441 = vmatpush1.bf16.msra.mxu0 %v1419
        %1442 = vmatprep.subr.bf16.mxu0 0
        %1443 = vmatpush1.bf16.msra.mxu0 %v1420
        %1444 = vmatprep.subr.bf16.mxu0 0
        %1445 = vmatpush1.bf16.msra.mxu0 %v1421
        %1446 = vmatprep.subr.bf16.mxu0 0
        %1447 = vmatpush1.bf16.msra.mxu0 0
        %1448 = vmatprep.subr.bf16.mxu0 0
        %1449 = vmatpush1.bf16.msra.mxu0 0
        %1450 = vmatprep.subr.bf16.mxu0 0
        %1451 = vmatpush1.bf16.msra.mxu0 0
        %1452 = vmatprep.subr.bf16.mxu0 0
        %1453 = vmatpush1.bf16.msra.mxu0 0
        %1454 = vmatprep.subr.bf16.mxu0 0
        %1455 = vmatpush1.bf16.msra.mxu0 0
        %1456 = vmatprep.subr.bf16.mxu0 0
        %1457 = vmatpush1.bf16.msra.mxu0 0
        %1458 = vmatprep.subr.bf16.mxu0 0
        %1459 = vmatpush1.bf16.msra.mxu0 0
        %1460 = vmatprep.subr.bf16.mxu0 0
        %1461 = vmatpush1.bf16.msra.mxu0 0
        %1462 = vmatprep.mubr.bf16.mxu0 0
        %1463 = vmatmul.mubr.bf16.gmra.mrb[0].mxu0 %v1251
        %v1464 = vpop.f32.mrb[0].mxu0
        %v1465 = vadd.f32 %v1376, %v1464
        %v1466 = vpop.f32.mrb[0].mxu0
        %v1467 = vpop.f32.mrb[0].mxu0
        %v1468 = vadd.f32 %v1379, %v1467
        %v1469 = vpop.f32.mrb[0].mxu0
        %1470 = vdwg.mxu0
        %s1471 = scalar_lea.vmem [#allocation10], 128
        %v1472 = vld [vmem:[%s1471] sm:$0xf]
        %v1473 = vld [vmem:[%s1471 + $0x4] sm:$0xf]
        %v1474 = vld [vmem:[%s1471 + $0x8] sm:$0xf]
        %v1475 = vld [vmem:[%s1471 + $0xc] sm:$0xf]
        %v1476 = vld [vmem:[%s1471 + $0x10] sm:$0xf]
        %v1477 = vld [vmem:[%s1471 + $0x14] sm:$0xf]
        %v1478 = vld [vmem:[%s1471 + $0x18] sm:$0xf]
        %v1479 = vld [vmem:[%s1471 + $0x1c] sm:$0xf]
        %v1480 = vld [vmem:[%s1471 + $0x20] sm:$0xf]
        %v1481 = vld [vmem:[%s1471 + $0x24] sm:$0xf]
        %v1482 = vld [vmem:[%s1471 + $0x28] sm:$0xf]
        %v1483 = vld [vmem:[%s1471 + $0x2c] sm:$0xf]
        %v1484 = vld [vmem:[%s1471 + $0x30] sm:$0xf]
        %v1485 = vld [vmem:[%s1471 + $0x34] sm:$0xf]
        %v1486 = vld [vmem:[%s1471 + $0x38] sm:$0xf]
        %v1487 = vld [vmem:[%s1471 + $0x3c] sm:$0xf]
        %v1504 = vunpack.c.l.b16 %v1472
        %v1505 = vunpack.c.l.b16 %v1473
        %v1506 = vunpack.c.l.b16 %v1474
        %v1507 = vunpack.c.l.b16 %v1475
        %v1508 = vunpack.c.l.b16 %v1476
        %v1509 = vunpack.c.l.b16 %v1477
        %v1510 = vunpack.c.l.b16 %v1478
        %v1511 = vunpack.c.l.b16 %v1479
        %v1512 = vunpack.c.l.b16 %v1480
        %v1513 = vunpack.c.l.b16 %v1481
        %v1514 = vunpack.c.l.b16 %v1482
        %v1515 = vunpack.c.l.b16 %v1483
        %v1516 = vunpack.c.l.b16 %v1484
        %v1517 = vunpack.c.l.b16 %v1485
        %v1518 = vunpack.c.l.b16 %v1486
        %v1519 = vunpack.c.l.b16 %v1487
        %v1520 = vpack.c.b16 %v1505, %v1504
        %v1521 = vpack.c.b16 %v1507, %v1506
        %v1522 = vpack.c.b16 %v1509, %v1508
        %v1523 = vpack.c.b16 %v1511, %v1510
        %v1524 = vpack.c.b16 %v1513, %v1512
        %v1525 = vpack.c.b16 %v1515, %v1514
        %v1526 = vpack.c.b16 %v1517, %v1516
        %v1527 = vpack.c.b16 %v1519, %v1518
        %1536 = vmatprep.subr.bf16.mxu0 0
        %1537 = vmatpush1.bf16.msra.mxu0 %v1520
        %1538 = vmatprep.subr.bf16.mxu0 0
        %1539 = vmatpush1.bf16.msra.mxu0 %v1521
        %1540 = vmatprep.subr.bf16.mxu0 0
        %1541 = vmatpush1.bf16.msra.mxu0 %v1522
        %1542 = vmatprep.subr.bf16.mxu0 0
        %1543 = vmatpush1.bf16.msra.mxu0 %v1523
        %1544 = vmatprep.subr.bf16.mxu0 0
        %1545 = vmatpush1.bf16.msra.mxu0 %v1524
        %1546 = vmatprep.subr.bf16.mxu0 0
        %1547 = vmatpush1.bf16.msra.mxu0 %v1525
        %1548 = vmatprep.subr.bf16.mxu0 0
        %1549 = vmatpush1.bf16.msra.mxu0 %v1526
        %1550 = vmatprep.subr.bf16.mxu0 0
        %1551 = vmatpush1.bf16.msra.mxu0 %v1527
        %1552 = vmatprep.subr.bf16.mxu0 0
        %1553 = vmatpush1.bf16.msra.mxu0 0
        %1554 = vmatprep.subr.bf16.mxu0 0
        %1555 = vmatpush1.bf16.msra.mxu0 0
        %1556 = vmatprep.subr.bf16.mxu0 0
        %1557 = vmatpush1.bf16.msra.mxu0 0
        %1558 = vmatprep.subr.bf16.mxu0 0
        %1559 = vmatpush1.bf16.msra.mxu0 0
        %1560 = vmatprep.subr.bf16.mxu0 0
        %1561 = vmatpush1.bf16.msra.mxu0 0
        %1562 = vmatprep.subr.bf16.mxu0 0
        %1563 = vmatpush1.bf16.msra.mxu0 0
        %1564 = vmatprep.subr.bf16.mxu0 0
        %1565 = vmatpush1.bf16.msra.mxu0 0
        %1566 = vmatprep.subr.bf16.mxu0 0
        %1567 = vmatpush1.bf16.msra.mxu0 0
        %1568 = vmatprep.mubr.bf16.mxu0 0
        %1569 = vmatmul.mubr.bf16.gmra.mrb[0].mxu0 %v1259
        %v1570 = vpop.f32.mrb[0].mxu0
        %v1571 = vadd.f32 0.0, %v1570
        %v1572 = vpop.f32.mrb[0].mxu0
        %v1573 = vpop.f32.mrb[0].mxu0
        %v1574 = vadd.f32 0.0, %v1573
        %v1575 = vpop.f32.mrb[0].mxu0
        %1576 = vdwg.mxu0
        %v1577 = vadd.f32 %v1465, %v1571
        %v1578 = vadd.f32 %v1468, %v1574
        %v1579 = vld [vmem:[%s9] sm:$0x1]
        %v1581 = vlaneseq
        %v1582 = vshrl.u32 %v1581, 7
        %v1583 = vsub.s32 0, %v1582
        %v1584 = vrot.slane %v1579, %v1583
        %v1586 = vadd.f32 %v1577, %v1584
        %v1587 = vadd.f32 %v1578, %v1584
        %v1588 = vmax.f32 %v1586, 0.0
        %v1589 = vmax.f32 %v1587, 0.0
        %1590 = vst [vmem:[%s457] sm:$0xff] %v1588
        %1591 = vst [vmem:[%s457 + $0x8] sm:$0xff] %v1589
        %s1592 = sand.u32 %s259, 1
        %s1593 = scalar_lea.sflag [#allocation4], %s1592
        %s1594 = sand.u32 %s259, 1
        %s1595 = smul.addr %s1594, 16
        %s1596 = scalar_lea.vmem [#allocation11], %s1595
        // Predicated region
        $region81: #{residual_up_forward.1} parent=59 // pred_check
          %p1597 = pneg %p269
        $region82: #{residual_up_forward.1} parent=59 // pred_check_branch
          %1599 = sbr.rel (%p1597) target = $region84
        $region83: #{residual_up_forward.1} parent=59 // pred_region
          %s1601 = ssub.s32 256, 256
          %1602 = vsyncadd %s1593, %s1601
          %s1603 = smul.addr %s31, 2
          %s1604 = smul.addr %s1603, 128
          %s1605 = scalar_lea.hbm %s10, %s1604
          %s1606 = sshll.u32 %s1596, 4
          %s1607 = int_to_ptr.vmem [resolvable:$true] %s1606
          %1612 = dma.vmem_to_hbm [thread:$0]  %s1607, 256, %s1605, %s1593, 128, 128, 8
        $region84: #{residual_up_forward.1} parent=59 // pred_fallthru
          _
      $region60: #{residual_up_forward.1} parent=5 // pred_fallthru
        _
      %p1613 = scmp.le.s32.totalorder 2, %s26
      // Predicated region
      $region85: #{residual_up_forward.1} parent=5 // pred_check
        %p1614 = pneg %p1613
      $region86: #{residual_up_forward.1} parent=5 // pred_check_branch
        %1616 = sbr.rel (%p1614) target = $region88
      $region87: #{residual_up_forward.1} parent=5 // pred_region
        %s1617 = ssub.s32 %s26, 2
        // Predicated region
        $region89: #{residual_up_forward.1} parent=87 // pred_check
          %p1618 = pneg %p275
        $region90: #{residual_up_forward.1} parent=87 // pred_check_branch
          %1620 = sbr.rel (%p1618) target = $region92
        $region91: #{residual_up_forward.1} parent=87 // pred_region
          %s1621 = sand.u32 %s260, 1
          %s1622 = scalar_lea.sflag [#allocation4], %s1621
          %s1623 = sand.u32 %s260, 1
          %s1624 = smul.addr %s1623, 16
          %s1625 = scalar_lea.vmem [#allocation11], %s1624
          %1626 = dma.done %s1622, 256
        $region92: #{residual_up_forward.1} parent=87 // pred_fallthru
          _
      $region88: #{residual_up_forward.1} parent=5 // pred_fallthru
        _
    $region6: #{residual_up_forward.1} parent=1 // loop_footer
      %s30 = sadd.s32 1, %s26
    $region7: #{residual_up_forward.1} parent=1 // loop_footer_branch
      %25 = sbr.rel target = $region3
    $region8: #{residual_up_forward.1} parent=1 // loop_exit
      _
    %1627 = vsyncpa [#allocation3], 1
    %s1628 = scalar_lea.sflag [#allocation3], 1
    %1629 = vsyncpa %s1628, 1
    %1630 = vsyncpa [#allocation6], 1
    %s1631 = scalar_lea.sflag [#allocation6], 1
    %1632 = vsyncpa %s1631, 1
    %1633 = vsyncpa [#allocation9], 1
    %1634 = vsyncpa [#allocation4], 1
    %s1635 = scalar_lea.sflag [#allocation4], 1
    %1636 = vsyncpa %s1635, 1

</llo_original>
